<compile_context>
chip_gen: v7x
topology: tpu7x:2x2x1
jax: 0.10.0
libtpu: 0.0.40
codegen_flags: <defaults>
</compile_context>

<pallas_src>
import functools

import jax
import jax.numpy as jnp
from jax.experimental import pallas as pl
from jax.experimental.pallas import tpu as pltpu

_LANE = 128          # vreg lane width
_BF16_SUBLANE = 16   # bf16 native sublane tile


def _round_up(x, m):
    return ((x + m - 1) // m) * m


def _pad_to(x, shape):
    pads = [(0, s - d) for d, s in zip(x.shape, shape)]
    return jnp.pad(x, pads)


def _choose_batch_tile(batch):
    """Pick (TB, Bp): TB a multiple of 16 (bf16 sublane tile), >=2 grid steps
    whenever the batch allows (so v7x megacore gets work on both TCs), and
    minimal padded-row waste (divisor-aware)."""
    b16 = _round_up(max(batch, _BF16_SUBLANE), _BF16_SUBLANE)
    if b16 <= _BF16_SUBLANE:
        return _BF16_SUBLANE, _BF16_SUBLANE       # tiny batch: single step
    max_tb = min(256, max(_BF16_SUBLANE,
                          (b16 // 2) // _BF16_SUBLANE * _BF16_SUBLANE))
    best = None
    for tb in range(max_tb, _BF16_SUBLANE - 1, -_BF16_SUBLANE):
        bp = _round_up(batch, tb)
        key = (bp // tb, bp - batch, -tb)   # fewest steps, least waste, big tile
        if best is None or key < best[0]:
            best = (key, tb, bp)
    _, tb, bp = best
    return tb, bp


def _mlp_kernel(n_hidden_layers,
                z_ref, w_in_ref, b_in_ref, w_h_ref, b_h_ref,
                w_out_ref, b_out_ref, o_ref):
    # First layer: Linear(z_dim -> H) + ReLU.  bf16 x bf16 -> f32 accumulator.
    h = jnp.dot(z_ref[...], w_in_ref[...], preferred_element_type=jnp.float32)
    h = jnp.maximum(h + b_in_ref[...], 0.0)

    # Hidden layers, statically unrolled so the MXU sees back-to-back matmuls.
    for l in range(n_hidden_layers):
        h = jnp.dot(h.astype(jnp.bfloat16), w_h_ref[l],
                    preferred_element_type=jnp.float32)
        h = jnp.maximum(h + b_h_ref[l], 0.0)

    # Output layer: Linear(H -> x_dim), no activation; lane-dense f32 store.
    out = jnp.dot(h.astype(jnp.bfloat16), w_out_ref[...],
                  preferred_element_type=jnp.float32)
    o_ref[...] = (out + b_out_ref[...]).astype(o_ref.dtype)


def prepare_generator_params(params):
    """Pad + bf16-cast the generator weights ONCE (hoisted off the per-call
    path).  Zero padding is mathematically inert (padded rows/cols/biases are
    0 and ReLU(0)=0); z's feature dim is intentionally left unpadded."""
    w_in, b_in, w_h, b_h, w_out, b_out = params
    z_dim, H = w_in.shape
    L = w_h.shape[0]
    x_dim = w_out.shape[1]
    Hp = _round_up(H, _LANE)
    Xp = _round_up(x_dim, _LANE)

    prepared = {
        "w_in": _pad_to(w_in, (z_dim, Hp)).astype(jnp.bfloat16),
        "b_in": _pad_to(b_in.reshape(1, -1), (1, Hp)).astype(jnp.float32),
        "w_h": _pad_to(w_h, (L, Hp, Hp)).astype(jnp.bfloat16),
        "b_h": _pad_to(b_h.reshape(L, 1, -1), (L, 1, Hp)).astype(jnp.float32),
        "w_out": _pad_to(w_out, (Hp, Xp)).astype(jnp.bfloat16),
        "b_out": _pad_to(b_out.reshape(1, -1), (1, Xp)).astype(jnp.float32),
        "z_dim": int(z_dim),
        "x_dim": int(x_dim),
        "n_hidden_layers": int(L),
    }
    return jax.block_until_ready(prepared)


def generator_forward(z, prepared):
    """Generator forward pass as a single batch-tiled Pallas TPU kernel."""
    B, z_dim = z.shape
    assert z_dim == prepared["z_dim"]
    L = prepared["n_hidden_layers"]
    x_dim = prepared["x_dim"]
    Hp = prepared["w_in"].shape[1]
    Xp = prepared["w_out"].shape[1]

    TB, Bp = _choose_batch_tile(B)
    z_p = _pad_to(z, (Bp, z_dim)).astype(jnp.bfloat16)

    # Per-generation VMEM capacity (per TensorCore on v7x); conservative
    # fallback is the smallest deployed capacity (64 MiB).
    try:
        vmem_cap = int(pltpu.get_tpu_info().vmem_capacity_bytes)
    except Exception:
        vmem_cap = 64 * 1024 * 1024

    def _build(single_buffer_weights):
        const_kw = ({"pipeline_mode": pl.Buffered(1)}
                    if single_buffer_weights else {})
        wmult = 1 if single_buffer_weights else 2
        # Exact footprint: weights/biases (x buffer count) + double-buffered
        # z/out tiles + activation temporaries, plus a little headroom.
        weight_bytes = wmult * 2 * (z_dim * Hp + L * Hp * Hp + Hp * Xp)
        bias_bytes = wmult * 4 * (Hp + L * Hp + Xp)
        io_bytes = 2 * (TB * z_dim * 2 + TB * Xp * 4)
        act_bytes = 4 * TB * Hp * 4
        footprint = weight_bytes + bias_bytes + io_bytes + act_bytes
        vmem_limit = int(min(max(footprint + 4 * 1024 * 1024, 16 * 1024 * 1024),
                             vmem_cap - 8 * 1024 * 1024))

        # TODO(synk): when L*Hp*Hp bf16 weights approach the per-TC VMEM cap
        # (v7x: 64 MiB), stream w_h one (Hp, Hp) layer at a time over an inner
        # 'arbitrary' grid axis / pltpu.emit_pipeline instead of keeping the
        # whole stack resident.
        return pl.pallas_call(
            functools.partial(_mlp_kernel, L),
            out_shape=jax.ShapeDtypeStruct((Bp, Xp), jnp.float32),
            grid=(Bp // TB,),
            in_specs=[
                pl.BlockSpec((TB, z_dim), lambda i: (i, 0)),           # z tile
                pl.BlockSpec((z_dim, Hp), lambda i: (0, 0), **const_kw),
                pl.BlockSpec((1, Hp), lambda i: (0, 0), **const_kw),
                pl.BlockSpec((L, Hp, Hp), lambda i: (0, 0, 0), **const_kw),
                pl.BlockSpec((L, 1, Hp), lambda i: (0, 0, 0), **const_kw),
                pl.BlockSpec((Hp, Xp), lambda i: (0, 0), **const_kw),
                pl.BlockSpec((1, Xp), lambda i: (0, 0), **const_kw),
            ],
            out_specs=pl.BlockSpec((TB, Xp), lambda i: (i, 0)),  # lane-dense
            compiler_params=pltpu.CompilerParams(
                dimension_semantics=("parallel",),               # megacore
                vmem_limit_bytes=vmem_limit),
        )

    args = (z_p, prepared["w_in"], prepared["b_in"], prepared["w_h"],
            prepared["b_h"], prepared["w_out"], prepared["b_out"])
    try:
        out_p = _build(True)(*args)
    except Exception:
        # Fallback if single-buffered (Buffered(1)) constant blocks are not
        # supported by the installed jax/jaxlib; same kernel, default buffering.
        out_p = _build(False)(*args)

    return out_p[:B, :x_dim]


def init_params(key, z_dim, x_dim, n_hidden_layers, n_hidden_nodes):
    """Deterministic synthetic params (nn.Linear shapes, (in, out) layout)."""
    ks = jax.random.split(key, 6)
    scale = 0.1
    w_in = scale * jax.random.normal(ks[0], (z_dim, n_hidden_nodes), jnp.float32)
    b_in = scale * jax.random.normal(ks[1], (1, n_hidden_nodes), jnp.float32)
    w_h = scale * jax.random.normal(
        ks[2], (n_hidden_layers, n_hidden_nodes, n_hidden_nodes), jnp.float32)
    b_h = scale * jax.random.normal(
        ks[3], (n_hidden_layers, 1, n_hidden_nodes), jnp.float32)
    w_out = scale * jax.random.normal(ks[4], (n_hidden_nodes, x_dim), jnp.float32)
    b_out = scale * jax.random.normal(ks[5], (1, x_dim), jnp.float32)
    return w_in, b_in, w_h, b_h, w_out, b_out


def generator_forward_ref(z, params, n_hidden_layers):
    """Pure-JAX f32 reference for correctness checking."""
    w_in, b_in, w_h, b_h, w_out, b_out = params
    h = jnp.maximum(z @ w_in + b_in, 0.0)
    for l in range(n_hidden_layers):
        h = jnp.maximum(h @ w_h[l] + b_h[l], 0.0)
    return h @ w_out + b_out


if __name__ == "__main__":
    # Small shapes consistent with the module's forward (z: (batch, z_dim)).
    batch = 8
    z_dim = 16
    x_dim = 8
    n_hidden_layers = 4
    n_hidden_nodes = 32

    key = jax.random.PRNGKey(0)
    k_z, k_p = jax.random.split(key)
    z = jax.random.normal(k_z, (batch, z_dim), jnp.float32)
    params = init_params(k_p, z_dim, x_dim, n_hidden_layers, n_hidden_nodes)

    # Pad / bf16-cast the weights once, off the per-call hot path.
    prepared = prepare_generator_params(params)

    out = generator_forward(z, prepared)
    out = jax.block_until_ready(out)

    ref = generator_forward_ref(z, params, n_hidden_layers)
    assert out.shape == (batch, x_dim)
    # bf16 matmul operands vs. f32 reference: relaxed tolerance (~1e-2 rel).
    assert jnp.allclose(out, ref, atol=1e-2, rtol=5e-2), (
        "mismatch vs reference: max abs diff = %g"
        % float(jnp.max(jnp.abs(out - ref))))

    print("KERNEL_OK")
</pallas_src>

<mosaic_0001>
module attributes {stable_mosaic.version = 11 : i64} {
  func.func @_mlp_kernel(%arg0: i32, %arg1: memref<16x16xbf16, #tpu.memory_space<vmem>>, %arg2: memref<16x128xbf16, #tpu.memory_space<vmem>>, %arg3: memref<1x128xf32, #tpu.memory_space<vmem>>, %arg4: memref<4x128x128xbf16, #tpu.memory_space<vmem>>, %arg5: memref<4x1x128xf32, #tpu.memory_space<vmem>>, %arg6: memref<128x128xbf16, #tpu.memory_space<vmem>>, %arg7: memref<1x128xf32, #tpu.memory_space<vmem>>, %arg8: memref<16x128xf32, #tpu.memory_space<vmem>>) attributes {dimension_semantics = [#tpu.dimension_semantics<parallel>], iteration_bounds = array<i64: 1>, scalar_prefetch = 0 : i64, scratch_operands = 0 : i64, tpu.core_type = #tpu.core_type<tc>, window_params = [{transform_indices = @transform_0, window_bounds = array<i64: 16, 16>}, {pipeline_mode = #tpu.pipeline_mode<synchronous>, transform_indices = @transform_1, window_bounds = array<i64: 16, 128>}, {pipeline_mode = #tpu.pipeline_mode<synchronous>, transform_indices = @transform_2, window_bounds = array<i64: 1, 128>}, {pipeline_mode = #tpu.pipeline_mode<synchronous>, transform_indices = @transform_3, window_bounds = array<i64: 4, 128, 128>}, {pipeline_mode = #tpu.pipeline_mode<synchronous>, transform_indices = @transform_4, window_bounds = array<i64: 4, 1, 128>}, {pipeline_mode = #tpu.pipeline_mode<synchronous>, transform_indices = @transform_5, window_bounds = array<i64: 128, 128>}, {pipeline_mode = #tpu.pipeline_mode<synchronous>, transform_indices = @transform_6, window_bounds = array<i64: 1, 128>}, {transform_indices = @transform_7, window_bounds = array<i64: 16, 128>}]} {
    %c0 = arith.constant 0 : index
    %c0_0 = arith.constant 0 : index
    %0 = vector.load %arg1[%c0, %c0_0] : memref<16x16xbf16, #tpu.memory_space<vmem>>, vector<16x16xbf16>
    %c0_1 = arith.constant 0 : index
    %c0_2 = arith.constant 0 : index
    %1 = vector.load %arg2[%c0_1, %c0_2] : memref<16x128xbf16, #tpu.memory_space<vmem>>, vector<16x128xbf16>
    %cst = arith.constant dense<0.000000e+00> : vector<16x128xf32>
    %2 = tpu.matmul %0, %1, %cst {dimension_numbers = #tpu.dot_dimension_numbers<[1], [0], [0], [1], [0, 0, 1, 1], [], []>} : vector<16x16xbf16>, vector<16x128xbf16>, vector<16x128xf32> -> vector<16x128xf32>
    %c0_3 = arith.constant 0 : index
    %c0_4 = arith.constant 0 : index
    %3 = vector.load %arg3[%c0_3, %c0_4] : memref<1x128xf32, #tpu.memory_space<vmem>>, vector<1x128xf32>
    %4 = vector.broadcast %3 : vector<1x128xf32> to vector<16x128xf32>
    %5 = arith.addf %2, %4 : vector<16x128xf32>
    %cst_5 = arith.constant 0.000000e+00 : f32
    %6 = vector.broadcast %cst_5 : f32 to vector<16x128xf32>
    %7 = arith.maximumf %5, %6 : vector<16x128xf32>
    %8 = arith.truncf %7 : vector<16x128xf32> to vector<16x128xbf16>
    %c0_6 = arith.constant 0 : index
    %c0_7 = arith.constant 0 : index
    %c0_8 = arith.constant 0 : index
    %9 = vector.load %arg4[%c0_6, %c0_7, %c0_8] : memref<4x128x128xbf16, #tpu.memory_space<vmem>>, vector<1x128x128xbf16>
    %10 = vector.shape_cast %9 : vector<1x128x128xbf16> to vector<128x128xbf16>
    %cst_9 = arith.constant dense<0.000000e+00> : vector<16x128xf32>
    %11 = tpu.matmul %8, %10, %cst_9 {dimension_numbers = #tpu.dot_dimension_numbers<[1], [0], [0], [1], [0, 0, 1, 1], [], []>} : vector<16x128xbf16>, vector<128x128xbf16>, vector<16x128xf32> -> vector<16x128xf32>
    %c0_10 = arith.constant 0 : index
    %c0_11 = arith.constant 0 : index
    %c0_12 = arith.constant 0 : index
    %12 = vector.load %arg5[%c0_10, %c0_11, %c0_12] : memref<4x1x128xf32, #tpu.memory_space<vmem>>, vector<1x1x128xf32>
    %13 = vector.shape_cast %12 : vector<1x1x128xf32> to vector<1x128xf32>
    %14 = vector.broadcast %13 : vector<1x128xf32> to vector<16x128xf32>
    %15 = arith.addf %11, %14 : vector<16x128xf32>
    %cst_13 = arith.constant 0.000000e+00 : f32
    %16 = vector.broadcast %cst_13 : f32 to vector<16x128xf32>
    %17 = arith.maximumf %15, %16 : vector<16x128xf32>
    %18 = arith.truncf %17 : vector<16x128xf32> to vector<16x128xbf16>
    %c1 = arith.constant 1 : index
    %c0_14 = arith.constant 0 : index
    %c0_15 = arith.constant 0 : index
    %19 = vector.load %arg4[%c1, %c0_14, %c0_15] : memref<4x128x128xbf16, #tpu.memory_space<vmem>>, vector<1x128x128xbf16>
    %20 = vector.shape_cast %19 : vector<1x128x128xbf16> to vector<128x128xbf16>
    %cst_16 = arith.constant dense<0.000000e+00> : vector<16x128xf32>
    %21 = tpu.matmul %18, %20, %cst_16 {dimension_numbers = #tpu.dot_dimension_numbers<[1], [0], [0], [1], [0, 0, 1, 1], [], []>} : vector<16x128xbf16>, vector<128x128xbf16>, vector<16x128xf32> -> vector<16x128xf32>
    %c1_17 = arith.constant 1 : index
    %c0_18 = arith.constant 0 : index
    %c0_19 = arith.constant 0 : index
    %22 = vector.load %arg5[%c1_17, %c0_18, %c0_19] : memref<4x1x128xf32, #tpu.memory_space<vmem>>, vector<1x1x128xf32>
    %23 = vector.shape_cast %22 : vector<1x1x128xf32> to vector<1x128xf32>
    %24 = vector.broadcast %23 : vector<1x128xf32> to vector<16x128xf32>
    %25 = arith.addf %21, %24 : vector<16x128xf32>
    %cst_20 = arith.constant 0.000000e+00 : f32
    %26 = vector.broadcast %cst_20 : f32 to vector<16x128xf32>
    %27 = arith.maximumf %25, %26 : vector<16x128xf32>
    %28 = arith.truncf %27 : vector<16x128xf32> to vector<16x128xbf16>
    %c2 = arith.constant 2 : index
    %c0_21 = arith.constant 0 : index
    %c0_22 = arith.constant 0 : index
    %29 = vector.load %arg4[%c2, %c0_21, %c0_22] : memref<4x128x128xbf16, #tpu.memory_space<vmem>>, vector<1x128x128xbf16>
    %30 = vector.shape_cast %29 : vector<1x128x128xbf16> to vector<128x128xbf16>
    %cst_23 = arith.constant dense<0.000000e+00> : vector<16x128xf32>
    %31 = tpu.matmul %28, %30, %cst_23 {dimension_numbers = #tpu.dot_dimension_numbers<[1], [0], [0], [1], [0, 0, 1, 1], [], []>} : vector<16x128xbf16>, vector<128x128xbf16>, vector<16x128xf32> -> vector<16x128xf32>
    %c2_24 = arith.constant 2 : index
    %c0_25 = arith.constant 0 : index
    %c0_26 = arith.constant 0 : index
    %32 = vector.load %arg5[%c2_24, %c0_25, %c0_26] : memref<4x1x128xf32, #tpu.memory_space<vmem>>, vector<1x1x128xf32>
    %33 = vector.shape_cast %32 : vector<1x1x128xf32> to vector<1x128xf32>
    %34 = vector.broadcast %33 : vector<1x128xf32> to vector<16x128xf32>
    %35 = arith.addf %31, %34 : vector<16x128xf32>
    %cst_27 = arith.constant 0.000000e+00 : f32
    %36 = vector.broadcast %cst_27 : f32 to vector<16x128xf32>
    %37 = arith.maximumf %35, %36 : vector<16x128xf32>
    %38 = arith.truncf %37 : vector<16x128xf32> to vector<16x128xbf16>
    %c3 = arith.constant 3 : index
    %c0_28 = arith.constant 0 : index
    %c0_29 = arith.constant 0 : index
    %39 = vector.load %arg4[%c3, %c0_28, %c0_29] : memref<4x128x128xbf16, #tpu.memory_space<vmem>>, vector<1x128x128xbf16>
    %40 = vector.shape_cast %39 : vector<1x128x128xbf16> to vector<128x128xbf16>
    %cst_30 = arith.constant dense<0.000000e+00> : vector<16x128xf32>
    %41 = tpu.matmul %38, %40, %cst_30 {dimension_numbers = #tpu.dot_dimension_numbers<[1], [0], [0], [1], [0, 0, 1, 1], [], []>} : vector<16x128xbf16>, vector<128x128xbf16>, vector<16x128xf32> -> vector<16x128xf32>
    %c3_31 = arith.constant 3 : index
    %c0_32 = arith.constant 0 : index
    %c0_33 = arith.constant 0 : index
    %42 = vector.load %arg5[%c3_31, %c0_32, %c0_33] : memref<4x1x128xf32, #tpu.memory_space<vmem>>, vector<1x1x128xf32>
    %43 = vector.shape_cast %42 : vector<1x1x128xf32> to vector<1x128xf32>
    %44 = vector.broadcast %43 : vector<1x128xf32> to vector<16x128xf32>
    %45 = arith.addf %41, %44 : vector<16x128xf32>
    %cst_34 = arith.constant 0.000000e+00 : f32
    %46 = vector.broadcast %cst_34 : f32 to vector<16x128xf32>
    %47 = arith.maximumf %45, %46 : vector<16x128xf32>
    %48 = arith.truncf %47 : vector<16x128xf32> to vector<16x128xbf16>
    %c0_35 = arith.constant 0 : index
    %c0_36 = arith.constant 0 : index
    %49 = vector.load %arg6[%c0_35, %c0_36] : memref<128x128xbf16, #tpu.memory_space<vmem>>, vector<128x128xbf16>
    %cst_37 = arith.constant dense<0.000000e+00> : vector<16x128xf32>
    %50 = tpu.matmul %48, %49, %cst_37 {dimension_numbers = #tpu.dot_dimension_numbers<[1], [0], [0], [1], [0, 0, 1, 1], [], []>} : vector<16x128xbf16>, vector<128x128xbf16>, vector<16x128xf32> -> vector<16x128xf32>
    %c0_38 = arith.constant 0 : index
    %c0_39 = arith.constant 0 : index
    %51 = vector.load %arg7[%c0_38, %c0_39] : memref<1x128xf32, #tpu.memory_space<vmem>>, vector<1x128xf32>
    %52 = vector.broadcast %51 : vector<1x128xf32> to vector<16x128xf32>
    %53 = arith.addf %50, %52 : vector<16x128xf32>
    %c0_40 = arith.constant 0 : index
    %c0_41 = arith.constant 0 : index
    %54 = vector.load %arg8[%c0_40, %c0_41] : memref<16x128xf32, #tpu.memory_space<vmem>>, vector<16x128xf32>
    tpu.vector_store %arg8[%c0_40, %c0_41], %53 {strides = array<i32>} : memref<16x128xf32, #tpu.memory_space<vmem>>, vector<16x128xf32>,
    return
  }
  func.func @transform_0(%arg0: i32) -> (i32, i32) {
    %c0_i32 = arith.constant 0 : i32
    %c0_i32_0 = arith.constant 0 : i32
    return %arg0, %c0_i32 : i32, i32
  }
  func.func @transform_1(%arg0: i32) -> (i32, i32) {
    %c0_i32 = arith.constant 0 : i32
    %c0_i32_0 = arith.constant 0 : i32
    %c0_i32_1 = arith.constant 0 : i32
    return %c0_i32, %c0_i32_0 : i32, i32
  }
  func.func @transform_2(%arg0: i32) -> (i32, i32) {
    %c0_i32 = arith.constant 0 : i32
    %c0_i32_0 = arith.constant 0 : i32
    %c0_i32_1 = arith.constant 0 : i32
    return %c0_i32, %c0_i32_0 : i32, i32
  }
  func.func @transform_3(%arg0: i32) -> (i32, i32, i32) {
    %c0_i32 = arith.constant 0 : i32
    %c0_i32_0 = arith.constant 0 : i32
    %c0_i32_1 = arith.constant 0 : i32
    %c0_i32_2 = arith.constant 0 : i32
    return %c0_i32, %c0_i32_0, %c0_i32_1 : i32, i32, i32
  }
  func.func @transform_4(%arg0: i32) -> (i32, i32, i32) {
    %c0_i32 = arith.constant 0 : i32
    %c0_i32_0 = arith.constant 0 : i32
    %c0_i32_1 = arith.constant 0 : i32
    %c0_i32_2 = arith.constant 0 : i32
    return %c0_i32, %c0_i32_0, %c0_i32_1 : i32, i32, i32
  }
  func.func @transform_5(%arg0: i32) -> (i32, i32) {
    %c0_i32 = arith.constant 0 : i32
    %c0_i32_0 = arith.constant 0 : i32
    %c0_i32_1 = arith.constant 0 : i32
    return %c0_i32, %c0_i32_0 : i32, i32
  }
  func.func @transform_6(%arg0: i32) -> (i32, i32) {
    %c0_i32 = arith.constant 0 : i32
    %c0_i32_0 = arith.constant 0 : i32
    %c0_i32_1 = arith.constant 0 : i32
    return %c0_i32, %c0_i32_0 : i32, i32
  }
  func.func @transform_7(%arg0: i32) -> (i32, i32) {
    %c0_i32 = arith.constant 0 : i32
    %c0_i32_0 = arith.constant 0 : i32
    return %arg0, %c0_i32 : i32, i32
  }
}

module attributes {stable_mosaic.version = 11 : i64} {
  func.func @_mlp_kernel(%arg0: i32, %arg1: memref<16x16xbf16, #tpu.memory_space<vmem>>, %arg2: memref<16x128xbf16, #tpu.memory_space<vmem>>, %arg3: memref<1x128xf32, #tpu.memory_space<vmem>>, %arg4: memref<4x128x128xbf16, #tpu.memory_space<vmem>>, %arg5: memref<4x1x128xf32, #tpu.memory_space<vmem>>, %arg6: memref<128x128xbf16, #tpu.memory_space<vmem>>, %arg7: memref<1x128xf32, #tpu.memory_space<vmem>>, %arg8: memref<16x128xf32, #tpu.memory_space<vmem>>) attributes {dimension_semantics = [#tpu.dimension_semantics<parallel>], iteration_bounds = array<i64: 1>, scalar_prefetch = 0 : i64, scratch_operands = 0 : i64, tpu.core_type = #tpu.core_type<tc>, window_params = [{transform_indices = @transform_0, window_bounds = array<i64: 16, 16>}, {pipeline_mode = #tpu.pipeline_mode<synchronous>, transform_indices = @transform_1, window_bounds = array<i64: 16, 128>}, {pipeline_mode = #tpu.pipeline_mode<synchronous>, transform_indices = @transform_2, window_bounds = array<i64: 1, 128>}, {pipeline_mode = #tpu.pipeline_mode<synchronous>, transform_indices = @transform_3, window_bounds = array<i64: 4, 128, 128>}, {pipeline_mode = #tpu.pipeline_mode<synchronous>, transform_indices = @transform_4, window_bounds = array<i64: 4, 1, 128>}, {pipeline_mode = #tpu.pipeline_mode<synchronous>, transform_indices = @transform_5, window_bounds = array<i64: 128, 128>}, {pipeline_mode = #tpu.pipeline_mode<synchronous>, transform_indices = @transform_6, window_bounds = array<i64: 1, 128>}, {transform_indices = @transform_7, window_bounds = array<i64: 16, 128>}]} {
    %c0 = arith.constant 0 : index
    %c0_0 = arith.constant 0 : index
    %0 = vector.load %arg1[%c0, %c0_0] : memref<16x16xbf16, #tpu.memory_space<vmem>>, vector<16x16xbf16>
    %c0_1 = arith.constant 0 : index
    %c0_2 = arith.constant 0 : index
    %1 = vector.load %arg2[%c0_1, %c0_2] : memref<16x128xbf16, #tpu.memory_space<vmem>>, vector<16x128xbf16>
    %cst = arith.constant dense<0.000000e+00> : vector<16x128xf32>
    %2 = tpu.matmul %0, %1, %cst {dimension_numbers = #tpu.dot_dimension_numbers<[1], [0], [0], [1], [0, 0, 1, 1], [], []>} : vector<16x16xbf16>, vector<16x128xbf16>, vector<16x128xf32> -> vector<16x128xf32>
    %c0_3 = arith.constant 0 : index
    %c0_4 = arith.constant 0 : index
    %3 = vector.load %arg3[%c0_3, %c0_4] : memref<1x128xf32, #tpu.memory_space<vmem>>, vector<1x128xf32>
    %4 = vector.broadcast %3 : vector<1x128xf32> to vector<16x128xf32>
    %5 = arith.addf %2, %4 : vector<16x128xf32>
    %cst_5 = arith.constant 0.000000e+00 : f32
    %6 = vector.broadcast %cst_5 : f32 to vector<16x128xf32>
    %7 = arith.maximumf %5, %6 : vector<16x128xf32>
    %8 = arith.truncf %7 : vector<16x128xf32> to vector<16x128xbf16>
    %c0_6 = arith.constant 0 : index
    %c0_7 = arith.constant 0 : index
    %c0_8 = arith.constant 0 : index
    %9 = vector.load %arg4[%c0_6, %c0_7, %c0_8] : memref<4x128x128xbf16, #tpu.memory_space<vmem>>, vector<1x128x128xbf16>
    %10 = vector.shape_cast %9 : vector<1x128x128xbf16> to vector<128x128xbf16>
    %cst_9 = arith.constant dense<0.000000e+00> : vector<16x128xf32>
    %11 = tpu.matmul %8, %10, %cst_9 {dimension_numbers = #tpu.dot_dimension_numbers<[1], [0], [0], [1], [0, 0, 1, 1], [], []>} : vector<16x128xbf16>, vector<128x128xbf16>, vector<16x128xf32> -> vector<16x128xf32>
    %c0_10 = arith.constant 0 : index
    %c0_11 = arith.constant 0 : index
    %c0_12 = arith.constant 0 : index
    %12 = vector.load %arg5[%c0_10, %c0_11, %c0_12] : memref<4x1x128xf32, #tpu.memory_space<vmem>>, vector<1x1x128xf32>
    %13 = vector.shape_cast %12 : vector<1x1x128xf32> to vector<1x128xf32>
    %14 = vector.broadcast %13 : vector<1x128xf32> to vector<16x128xf32>
    %15 = arith.addf %11, %14 : vector<16x128xf32>
    %cst_13 = arith.constant 0.000000e+00 : f32
    %16 = vector.broadcast %cst_13 : f32 to vector<16x128xf32>
    %17 = arith.maximumf %15, %16 : vector<16x128xf32>
    %18 = arith.truncf %17 : vector<16x128xf32> to vector<16x128xbf16>
    %c1 = arith.constant 1 : index
    %c0_14 = arith.constant 0 : index
    %c0_15 = arith.constant 0 : index
    %19 = vector.load %arg4[%c1, %c0_14, %c0_15] : memref<4x128x128xbf16, #tpu.memory_space<vmem>>, vector<1x128x128xbf16>
    %20 = vector.shape_cast %19 : vector<1x128x128xbf16> to vector<128x128xbf16>
    %cst_16 = arith.constant dense<0.000000e+00> : vector<16x128xf32>
    %21 = tpu.matmul %18, %20, %cst_16 {dimension_numbers = #tpu.dot_dimension_numbers<[1], [0], [0], [1], [0, 0, 1, 1], [], []>} : vector<16x128xbf16>, vector<128x128xbf16>, vector<16x128xf32> -> vector<16x128xf32>
    %c1_17 = arith.constant 1 : index
    %c0_18 = arith.constant 0 : index
    %c0_19 = arith.constant 0 : index
    %22 = vector.load %arg5[%c1_17, %c0_18, %c0_19] : memref<4x1x128xf32, #tpu.memory_space<vmem>>, vector<1x1x128xf32>
    %23 = vector.shape_cast %22 : vector<1x1x128xf32> to vector<1x128xf32>
    %24 = vector.broadcast %23 : vector<1x128xf32> to vector<16x128xf32>
    %25 = arith.addf %21, %24 : vector<16x128xf32>
    %cst_20 = arith.constant 0.000000e+00 : f32
    %26 = vector.broadcast %cst_20 : f32 to vector<16x128xf32>
    %27 = arith.maximumf %25, %26 : vector<16x128xf32>
    %28 = arith.truncf %27 : vector<16x128xf32> to vector<16x128xbf16>
    %c2 = arith.constant 2 : index
    %c0_21 = arith.constant 0 : index
    %c0_22 = arith.constant 0 : index
    %29 = vector.load %arg4[%c2, %c0_21, %c0_22] : memref<4x128x128xbf16, #tpu.memory_space<vmem>>, vector<1x128x128xbf16>
    %30 = vector.shape_cast %29 : vector<1x128x128xbf16> to vector<128x128xbf16>
    %cst_23 = arith.constant dense<0.000000e+00> : vector<16x128xf32>
    %31 = tpu.matmul %28, %30, %cst_23 {dimension_numbers = #tpu.dot_dimension_numbers<[1], [0], [0], [1], [0, 0, 1, 1], [], []>} : vector<16x128xbf16>, vector<128x128xbf16>, vector<16x128xf32> -> vector<16x128xf32>
    %c2_24 = arith.constant 2 : index
    %c0_25 = arith.constant 0 : index
    %c0_26 = arith.constant 0 : index
    %32 = vector.load %arg5[%c2_24, %c0_25, %c0_26] : memref<4x1x128xf32, #tpu.memory_space<vmem>>, vector<1x1x128xf32>
    %33 = vector.shape_cast %32 : vector<1x1x128xf32> to vector<1x128xf32>
    %34 = vector.broadcast %33 : vector<1x128xf32> to vector<16x128xf32>
    %35 = arith.addf %31, %34 : vector<16x128xf32>
    %cst_27 = arith.constant 0.000000e+00 : f32
    %36 = vector.broadcast %cst_27 : f32 to vector<16x128xf32>
    %37 = arith.maximumf %35, %36 : vector<16x128xf32>
    %38 = arith.truncf %37 : vector<16x128xf32> to vector<16x128xbf16>
    %c3 = arith.constant 3 : index
    %c0_28 = arith.constant 0 : index
    %c0_29 = arith.constant 0 : index
    %39 = vector.load %arg4[%c3, %c0_28, %c0_29] : memref<4x128x128xbf16, #tpu.memory_space<vmem>>, vector<1x128x128xbf16>
    %40 = vector.shape_cast %39 : vector<1x128x128xbf16> to vector<128x128xbf16>
    %cst_30 = arith.constant dense<0.000000e+00> : vector<16x128xf32>
    %41 = tpu.matmul %38, %40, %cst_30 {dimension_numbers = #tpu.dot_dimension_numbers<[1], [0], [0], [1], [0, 0, 1, 1], [], []>} : vector<16x128xbf16>, vector<128x128xbf16>, vector<16x128xf32> -> vector<16x128xf32>
    %c3_31 = arith.constant 3 : index
    %c0_32 = arith.constant 0 : index
    %c0_33 = arith.constant 0 : index
    %42 = vector.load %arg5[%c3_31, %c0_32, %c0_33] : memref<4x1x128xf32, #tpu.memory_space<vmem>>, vector<1x1x128xf32>
    %43 = vector.shape_cast %42 : vector<1x1x128xf32> to vector<1x128xf32>
    %44 = vector.broadcast %43 : vector<1x128xf32> to vector<16x128xf32>
    %45 = arith.addf %41, %44 : vector<16x128xf32>
    %cst_34 = arith.constant 0.000000e+00 : f32
    %46 = vector.broadcast %cst_34 : f32 to vector<16x128xf32>
    %47 = arith.maximumf %45, %46 : vector<16x128xf32>
    %48 = arith.truncf %47 : vector<16x128xf32> to vector<16x128xbf16>
    %c0_35 = arith.constant 0 : index
    %c0_36 = arith.constant 0 : index
    %49 = vector.load %arg6[%c0_35, %c0_36] : memref<128x128xbf16, #tpu.memory_space<vmem>>, vector<128x128xbf16>
    %cst_37 = arith.constant dense<0.000000e+00> : vector<16x128xf32>
    %50 = tpu.matmul %48, %49, %cst_37 {dimension_numbers = #tpu.dot_dimension_numbers<[1], [0], [0], [1], [0, 0, 1, 1], [], []>} : vector<16x128xbf16>, vector<128x128xbf16>, vector<16x128xf32> -> vector<16x128xf32>
    %c0_38 = arith.constant 0 : index
    %c0_39 = arith.constant 0 : index
    %51 = vector.load %arg7[%c0_38, %c0_39] : memref<1x128xf32, #tpu.memory_space<vmem>>, vector<1x128xf32>
    %52 = vector.broadcast %51 : vector<1x128xf32> to vector<16x128xf32>
    %53 = arith.addf %50, %52 : vector<16x128xf32>
    %c0_40 = arith.constant 0 : index
    %c0_41 = arith.constant 0 : index
    %54 = vector.load %arg8[%c0_40, %c0_41] : memref<16x128xf32, #tpu.memory_space<vmem>>, vector<16x128xf32>
    tpu.vector_store %arg8[%c0_40, %c0_41], %53 {strides = array<i32>} : memref<16x128xf32, #tpu.memory_space<vmem>>, vector<16x128xf32>,
    return
  }
  func.func @transform_0(%arg0: i32) -> (i32, i32) {
    %c0_i32 = arith.constant 0 : i32
    %c0_i32_0 = arith.constant 0 : i32
    return %arg0, %c0_i32 : i32, i32
  }
  func.func @transform_1(%arg0: i32) -> (i32, i32) {
    %c0_i32 = arith.constant 0 : i32
    %c0_i32_0 = arith.constant 0 : i32
    %c0_i32_1 = arith.constant 0 : i32
    return %c0_i32, %c0_i32_0 : i32, i32
  }
  func.func @transform_2(%arg0: i32) -> (i32, i32) {
    %c0_i32 = arith.constant 0 : i32
    %c0_i32_0 = arith.constant 0 : i32
    %c0_i32_1 = arith.constant 0 : i32
    return %c0_i32, %c0_i32_0 : i32, i32
  }
  func.func @transform_3(%arg0: i32) -> (i32, i32, i32) {
    %c0_i32 = arith.constant 0 : i32
    %c0_i32_0 = arith.constant 0 : i32
    %c0_i32_1 = arith.constant 0 : i32
    %c0_i32_2 = arith.constant 0 : i32
    return %c0_i32, %c0_i32_0, %c0_i32_1 : i32, i32, i32
  }
  func.func @transform_4(%arg0: i32) -> (i32, i32, i32) {
    %c0_i32 = arith.constant 0 : i32
    %c0_i32_0 = arith.constant 0 : i32
    %c0_i32_1 = arith.constant 0 : i32
    %c0_i32_2 = arith.constant 0 : i32
    return %c0_i32, %c0_i32_0, %c0_i32_1 : i32, i32, i32
  }
  func.func @transform_5(%arg0: i32) -> (i32, i32) {
    %c0_i32 = arith.constant 0 : i32
    %c0_i32_0 = arith.constant 0 : i32
    %c0_i32_1 = arith.constant 0 : i32
    return %c0_i32, %c0_i32_0 : i32, i32
  }
  func.func @transform_6(%arg0: i32) -> (i32, i32) {
    %c0_i32 = arith.constant 0 : i32
    %c0_i32_0 = arith.constant 0 : i32
    %c0_i32_1 = arith.constant 0 : i32
    return %c0_i32, %c0_i32_0 : i32, i32
  }
  func.func @transform_7(%arg0: i32) -> (i32, i32) {
    %c0_i32 = arith.constant 0 : i32
    %c0_i32_0 = arith.constant 0 : i32
    return %arg0, %c0_i32 : i32, i32
  }
}

</mosaic_0001>

<llo_original>
// kernel: tpu_custom_call.1
$region0: #{tpu_custom_call.1}
  #allocation0 [shape = 'u32[]', space=smem, size = 0x4, offset = 0x4, fixed_abs, tag = 'smem constant byte address 0x4 - core index']
  #allocation1 [shape = 'u32[144,128]{1,0:T(1,128)}', space=vmem, size = 0x12000, scoped, tag = 'internal scratch']
  %s0 = inlined_call_operand.hbm [shape: bf16[16,16], index: 0, kind: input, shape index: {}]
  %s1 = inlined_call_operand.hbm [shape: bf16[16,128], index: 1, kind: input, shape index: {}]
  %s2 = inlined_call_operand.vmem [shape: f32[1,128], index: 2, kind: input, shape index: {}]
  %s3 = inlined_call_operand.hbm [shape: bf16[4,128,128], index: 3, kind: input, shape index: {}]
  %s4 = inlined_call_operand.vmem [shape: f32[4,1,128], index: 4, kind: input, shape index: {}]
  %s5 = inlined_call_operand.hbm [shape: bf16[128,128], index: 5, kind: input, shape index: {}]
  %s6 = inlined_call_operand.vmem [shape: f32[1,128], index: 6, kind: input, shape index: {}]
  %s7 = inlined_call_operand.hbm [shape: f32[16,128], index: 7, kind: output, shape index: {}]
  %s8 = sld [smem:[#allocation0]]
  $region54: #{tpu_custom_call.1} parent=0
    _
  %s10 = ssub.s32 1, %s8
  %s11 = scalar_select 0, %s10, %s8
  $region1: #{tpu_custom_call.1} parent=0
    #allocation2 [shape = 'u8[4096]{0}', space=vmem, size = 0x1000, scoped, tag = 'input window, operand 0, single buffered']
    #allocation3 [shape = 's32[1]{0}', space=sflag, size = 0x4, scoped, tag = 'scoped memory for tpu_custom_call.1']
    #allocation4 [shape = 's32[1]{0}', space=sflag, size = 0x4, scoped, tag = 'scoped memory for tpu_custom_call.1']
    #allocation5 [shape = 'u8[4096]{0}', space=vmem, size = 0x1000, scoped, tag = 'input window, operand 1, single buffered']
    #allocation6 [shape = 's32[1]{0}', space=sflag, size = 0x4, scoped, tag = 'scoped memory for tpu_custom_call.1']
    #allocation7 [shape = 'u8[131072]{0}', space=vmem, size = 0x20000, scoped, tag = 'input window, operand 3, single buffered']
    #allocation8 [shape = 'u8[32768]{0}', space=vmem, size = 0x8000, scoped, tag = 'input window, operand 5, single buffered']
    #allocation9 [shape = 's32[1]{0}', space=sflag, size = 0x4, scoped, tag = 'scoped memory for tpu_custom_call.1']
    #allocation10 [shape = 'u8[8192]{0}', space=vmem, size = 0x2000, scoped, tag = 'output window, operand 0, single buffered']
    %12 = vsyncpa [#allocation3], 0
    %13 = vsyncpa [#allocation6], 0
    %14 = vsyncpa [#allocation9], 0
    %15 = vsyncpa [#allocation4], 0
    // Predicated region
    $region2: #{tpu_custom_call.1} parent=1 // pred_check
      _
    $region3: #{tpu_custom_call.1} parent=1 // pred_check_branch
      %17 = sbr.rel (0) target = $region5
    $region4: #{tpu_custom_call.1} parent=1 // pred_region
      %s19 = ssub.s32 128, 128
      %20 = vsyncadd [#allocation3], %s19
      %s21 = sshll.u32 [#allocation2], 4
      %s22 = int_to_ptr.vmem [resolvable:$true] %s21
      %27 = dma.hbm_to_vmem [thread:$0]  %s0, 128, %s22, [#allocation3], 64, 64, 4
    $region5: #{tpu_custom_call.1} parent=1 // pred_fallthru
      _
    // Predicated region
    $region6: #{tpu_custom_call.1} parent=1 // pred_check
      _
    $region7: #{tpu_custom_call.1} parent=1 // pred_check_branch
      %29 = sbr.rel (0) target = $region9
    $region8: #{tpu_custom_call.1} parent=1 // pred_region
      %s31 = ssub.s32 128, 128
      %32 = vsyncadd [#allocation6], %s31
      %s33 = sshll.u32 [#allocation5], 4
      %s34 = int_to_ptr.vmem [resolvable:$true] %s33
      %39 = dma.hbm_to_vmem [thread:$0]  %s1, 128, %s34, [#allocation6], 64, 64, 4
    $region9: #{tpu_custom_call.1} parent=1 // pred_fallthru
      _
    // Predicated region
    $region10: #{tpu_custom_call.1} parent=1 // pred_check
      _
    $region11: #{tpu_custom_call.1} parent=1 // pred_check_branch
      %41 = sbr.rel (0) target = $region13
    $region12: #{tpu_custom_call.1} parent=1 // pred_region
      _
    $region13: #{tpu_custom_call.1} parent=1 // pred_fallthru
      _
    // Predicated region
    $region14: #{tpu_custom_call.1} parent=1 // pred_check
      _
    $region15: #{tpu_custom_call.1} parent=1 // pred_check_branch
      %43 = sbr.rel (0) target = $region17
    $region16: #{tpu_custom_call.1} parent=1 // pred_region
      %s45 = ssub.s32 4096, 4096
      %46 = vsyncadd [#allocation6], %s45
      %s47 = sshll.u32 [#allocation7], 4
      %s48 = int_to_ptr.vmem [resolvable:$true] %s47
      %53 = dma.hbm_to_vmem [thread:$0]  %s3, 4096, %s48, [#allocation6], 64, 64, 4
    $region17: #{tpu_custom_call.1} parent=1 // pred_fallthru
      _
    // Predicated region
    $region18: #{tpu_custom_call.1} parent=1 // pred_check
      _
    $region19: #{tpu_custom_call.1} parent=1 // pred_check_branch
      %55 = sbr.rel (0) target = $region21
    $region20: #{tpu_custom_call.1} parent=1 // pred_region
      _
    $region21: #{tpu_custom_call.1} parent=1 // pred_fallthru
      _
    // Predicated region
    $region22: #{tpu_custom_call.1} parent=1 // pred_check
      _
    $region23: #{tpu_custom_call.1} parent=1 // pred_check_branch
      %57 = sbr.rel (0) target = $region25
    $region24: #{tpu_custom_call.1} parent=1 // pred_region
      %s59 = ssub.s32 1024, 1024
      %60 = vsyncadd [#allocation9], %s59
      %s61 = sshll.u32 [#allocation8], 4
      %s62 = int_to_ptr.vmem [resolvable:$true] %s61
      %67 = dma.hbm_to_vmem [thread:$0]  %s5, 1024, %s62, [#allocation9], 64, 64, 4
    $region25: #{tpu_custom_call.1} parent=1 // pred_fallthru
      _
    // Predicated region
    $region26: #{tpu_custom_call.1} parent=1 // pred_check
      _
    $region27: #{tpu_custom_call.1} parent=1 // pred_check_branch
      %69 = sbr.rel (0) target = $region29
    $region28: #{tpu_custom_call.1} parent=1 // pred_region
      _
    $region29: #{tpu_custom_call.1} parent=1 // pred_fallthru
      _
    // Predicated region
    $region30: #{tpu_custom_call.1} parent=1 // pred_check
      _
    $region31: #{tpu_custom_call.1} parent=1 // pred_check_branch
      %71 = sbr.rel (0) target = $region33
    $region32: #{tpu_custom_call.1} parent=1 // pred_region
      %72 = dma.done [#allocation3], 128
    $region33: #{tpu_custom_call.1} parent=1 // pred_fallthru
      _
    // Predicated region
    $region34: #{tpu_custom_call.1} parent=1 // pred_check
      _
    $region35: #{tpu_custom_call.1} parent=1 // pred_check_branch
      %74 = sbr.rel (0) target = $region37
    $region36: #{tpu_custom_call.1} parent=1 // pred_region
      %75 = dma.done [#allocation6], 128
    $region37: #{tpu_custom_call.1} parent=1 // pred_fallthru
      _
    // Predicated region
    $region38: #{tpu_custom_call.1} parent=1 // pred_check
      _
    $region39: #{tpu_custom_call.1} parent=1 // pred_check_branch
      %77 = sbr.rel (0) target = $region41
    $region40: #{tpu_custom_call.1} parent=1 // pred_region
      %78 = dma.done [#allocation6], 4096
    $region41: #{tpu_custom_call.1} parent=1 // pred_fallthru
      _
    // Predicated region
    $region42: #{tpu_custom_call.1} parent=1 // pred_check
      _
    $region43: #{tpu_custom_call.1} parent=1 // pred_check_branch
      %80 = sbr.rel (0) target = $region45
    $region44: #{tpu_custom_call.1} parent=1 // pred_region
      %81 = dma.done [#allocation9], 1024
    $region45: #{tpu_custom_call.1} parent=1 // pred_fallthru
      _
    %v83 = vld [vmem:[#allocation2] sm:$0xf]
    %v84 = vld [vmem:[#allocation2 + $0x4] sm:$0xf]
    %v85 = vld [vmem:[#allocation5] sm:$0xf]
    %v86 = vld [vmem:[#allocation5 + $0x4] sm:$0xf]
    %v87 = vld [vmem:[%s2] sm:$0x1]
    %v89 = vlaneseq
    %v90 = vshrl.u32 %v89, 7
    %v91 = vsub.s32 0, %v90
    %v92 = vrot.slane %v87, %v91
    %v96 = vunpack.c.l.b16 %v83
    %v97 = vunpack.c.l.b16 %v84
    %v98 = vpack.c.b16 %v97, %v96
    %v101 = vunpack.c.l.b16 %v85
    %v102 = vunpack.c.l.b16 %v86
    %v103 = vpack.c.b16 %v102, %v101
    %vm105 = vcmask 130048
    %v107 = vsel %vm105, %v98, 0
    %109 = vmatprep.subr.bf16.mxu0 0
    %110 = vmatpush1.bf16.msra.mxu0 %v103
    %111 = vmatprep.subr.bf16.mxu0 0
    %112 = vmatpush1.bf16.msra.mxu0 0
    %113 = vmatprep.subr.bf16.mxu0 0
    %114 = vmatpush1.bf16.msra.mxu0 0
    %115 = vmatprep.subr.bf16.mxu0 0
    %116 = vmatpush1.bf16.msra.mxu0 0
    %117 = vmatprep.subr.bf16.mxu0 0
    %118 = vmatpush1.bf16.msra.mxu0 0
    %119 = vmatprep.subr.bf16.mxu0 0
    %120 = vmatpush1.bf16.msra.mxu0 0
    %121 = vmatprep.subr.bf16.mxu0 0
    %122 = vmatpush1.bf16.msra.mxu0 0
    %123 = vmatprep.subr.bf16.mxu0 0
    %124 = vmatpush1.bf16.msra.mxu0 0
    %125 = vmatprep.subr.bf16.mxu0 0
    %126 = vmatpush1.bf16.msra.mxu0 0
    %127 = vmatprep.subr.bf16.mxu0 0
    %128 = vmatpush1.bf16.msra.mxu0 0
    %129 = vmatprep.subr.bf16.mxu0 0
    %130 = vmatpush1.bf16.msra.mxu0 0
    %131 = vmatprep.subr.bf16.mxu0 0
    %132 = vmatpush1.bf16.msra.mxu0 0
    %133 = vmatprep.subr.bf16.mxu0 0
    %134 = vmatpush1.bf16.msra.mxu0 0
    %135 = vmatprep.subr.bf16.mxu0 0
    %136 = vmatpush1.bf16.msra.mxu0 0
    %137 = vmatprep.subr.bf16.mxu0 0
    %138 = vmatpush1.bf16.msra.mxu0 0
    %139 = vmatprep.subr.bf16.mxu0 0
    %140 = vmatpush1.bf16.msra.mxu0 0
    %141 = vmatprep.mubr.bf16.mxu0 0
    %142 = vmatmul.mubr.bf16.gmra.mrb[0].mxu0 %v107
    %v143 = vpop.f32.mrb[0].mxu0
    %v144 = vadd.f32 %v92, %v143
    %v145 = vpop.f32.mrb[0].mxu0
    %v146 = vpop.f32.mrb[0].mxu0
    %v147 = vadd.f32 %v92, %v146
    %v148 = vpop.f32.mrb[0].mxu0
    %149 = vdwg.mxu0
    %v150 = vmax.f32 %v144, 0.0
    %v151 = vmax.f32 %v147, 0.0
    %v152 = vpack.c.bf16 %v151, %v150
    %v153 = vld [vmem:[#allocation7] sm:$0xf]
    %v154 = vld [vmem:[#allocation7 + $0x4] sm:$0xf]
    %v155 = vld [vmem:[#allocation7 + $0x8] sm:$0xf]
    %v156 = vld [vmem:[#allocation7 + $0xc] sm:$0xf]
    %v157 = vld [vmem:[#allocation7 + $0x10] sm:$0xf]
    %v158 = vld [vmem:[#allocation7 + $0x14] sm:$0xf]
    %v159 = vld [vmem:[#allocation7 + $0x18] sm:$0xf]
    %v160 = vld [vmem:[#allocation7 + $0x1c] sm:$0xf]
    %v161 = vld [vmem:[#allocation7 + $0x20] sm:$0xf]
    %v162 = vld [vmem:[#allocation7 + $0x24] sm:$0xf]
    %v163 = vld [vmem:[#allocation7 + $0x28] sm:$0xf]
    %v164 = vld [vmem:[#allocation7 + $0x2c] sm:$0xf]
    %v165 = vld [vmem:[#allocation7 + $0x30] sm:$0xf]
    %v166 = vld [vmem:[#allocation7 + $0x34] sm:$0xf]
    %v167 = vld [vmem:[#allocation7 + $0x38] sm:$0xf]
    %v168 = vld [vmem:[#allocation7 + $0x3c] sm:$0xf]
    %v169 = vld [vmem:[%s4] sm:$0x1]
    %v171 = vlaneseq
    %v172 = vshrl.u32 %v171, 7
    %v173 = vsub.s32 0, %v172
    %v174 = vrot.slane %v169, %v173
    %v192 = vunpack.c.l.b16 %v153
    %v193 = vunpack.c.l.b16 %v154
    %v194 = vunpack.c.l.b16 %v155
    %v195 = vunpack.c.l.b16 %v156
    %v196 = vunpack.c.l.b16 %v157
    %v197 = vunpack.c.l.b16 %v158
    %v198 = vunpack.c.l.b16 %v159
    %v199 = vunpack.c.l.b16 %v160
    %v200 = vunpack.c.l.b16 %v161
    %v201 = vunpack.c.l.b16 %v162
    %v202 = vunpack.c.l.b16 %v163
    %v203 = vunpack.c.l.b16 %v164
    %v204 = vunpack.c.l.b16 %v165
    %v205 = vunpack.c.l.b16 %v166
    %v206 = vunpack.c.l.b16 %v167
    %v207 = vunpack.c.l.b16 %v168
    %v208 = vpack.c.b16 %v193, %v192
    %v209 = vpack.c.b16 %v195, %v194
    %v210 = vpack.c.b16 %v197, %v196
    %v211 = vpack.c.b16 %v199, %v198
    %v212 = vpack.c.b16 %v201, %v200
    %v213 = vpack.c.b16 %v203, %v202
    %v214 = vpack.c.b16 %v205, %v204
    %v215 = vpack.c.b16 %v207, %v206
    %224 = vmatprep.subr.bf16.mxu0 0
    %225 = vmatpush1.bf16.msra.mxu0 %v208
    %226 = vmatprep.subr.bf16.mxu0 0
    %227 = vmatpush1.bf16.msra.mxu0 %v209
    %228 = vmatprep.subr.bf16.mxu0 0
    %229 = vmatpush1.bf16.msra.mxu0 %v210
    %230 = vmatprep.subr.bf16.mxu0 0
    %231 = vmatpush1.bf16.msra.mxu0 %v211
    %232 = vmatprep.subr.bf16.mxu0 0
    %233 = vmatpush1.bf16.msra.mxu0 %v212
    %234 = vmatprep.subr.bf16.mxu0 0
    %235 = vmatpush1.bf16.msra.mxu0 %v213
    %236 = vmatprep.subr.bf16.mxu0 0
    %237 = vmatpush1.bf16.msra.mxu0 %v214
    %238 = vmatprep.subr.bf16.mxu0 0
    %239 = vmatpush1.bf16.msra.mxu0 %v215
    %240 = vmatprep.subr.bf16.mxu0 0
    %241 = vmatpush1.bf16.msra.mxu0 0
    %242 = vmatprep.subr.bf16.mxu0 0
    %243 = vmatpush1.bf16.msra.mxu0 0
    %244 = vmatprep.subr.bf16.mxu0 0
    %245 = vmatpush1.bf16.msra.mxu0 0
    %246 = vmatprep.subr.bf16.mxu0 0
    %247 = vmatpush1.bf16.msra.mxu0 0
    %248 = vmatprep.subr.bf16.mxu0 0
    %249 = vmatpush1.bf16.msra.mxu0 0
    %250 = vmatprep.subr.bf16.mxu0 0
    %251 = vmatpush1.bf16.msra.mxu0 0
    %252 = vmatprep.subr.bf16.mxu0 0
    %253 = vmatpush1.bf16.msra.mxu0 0
    %254 = vmatprep.subr.bf16.mxu0 0
    %255 = vmatpush1.bf16.msra.mxu0 0
    %256 = vmatprep.mubr.bf16.mxu0 0
    %257 = vmatmul.mubr.bf16.gmra.mrb[0].mxu0 %v152
    %v258 = vpop.f32.mrb[0].mxu0
    %v259 = vadd.f32 %v174, %v258
    %v260 = vpop.f32.mrb[0].mxu0
    %v261 = vpop.f32.mrb[0].mxu0
    %v262 = vadd.f32 %v174, %v261
    %v263 = vpop.f32.mrb[0].mxu0
    %264 = vdwg.mxu0
    %v265 = vmax.f32 %v259, 0.0
    %v266 = vmax.f32 %v262, 0.0
    %v267 = vpack.c.bf16 %v266, %v265
    %s268 = scalar_lea.vmem [#allocation7], 64
    %v269 = vld [vmem:[%s268] sm:$0xf]
    %v270 = vld [vmem:[%s268 + $0x4] sm:$0xf]
    %v271 = vld [vmem:[%s268 + $0x8] sm:$0xf]
    %v272 = vld [vmem:[%s268 + $0xc] sm:$0xf]
    %v273 = vld [vmem:[%s268 + $0x10] sm:$0xf]
    %v274 = vld [vmem:[%s268 + $0x14] sm:$0xf]
    %v275 = vld [vmem:[%s268 + $0x18] sm:$0xf]
    %v276 = vld [vmem:[%s268 + $0x1c] sm:$0xf]
    %v277 = vld [vmem:[%s268 + $0x20] sm:$0xf]
    %v278 = vld [vmem:[%s268 + $0x24] sm:$0xf]
    %v279 = vld [vmem:[%s268 + $0x28] sm:$0xf]
    %v280 = vld [vmem:[%s268 + $0x2c] sm:$0xf]
    %v281 = vld [vmem:[%s268 + $0x30] sm:$0xf]
    %v282 = vld [vmem:[%s268 + $0x34] sm:$0xf]
    %v283 = vld [vmem:[%s268 + $0x38] sm:$0xf]
    %v284 = vld [vmem:[%s268 + $0x3c] sm:$0xf]
    %s285 = scalar_lea.vmem %s4, 1
    %v286 = vld [vmem:[%s285] sm:$0x1]
    %v288 = vlaneseq
    %v289 = vshrl.u32 %v288, 7
    %v290 = vsub.s32 0, %v289
    %v291 = vrot.slane %v286, %v290
    %v309 = vunpack.c.l.b16 %v269
    %v310 = vunpack.c.l.b16 %v270
    %v311 = vunpack.c.l.b16 %v271
    %v312 = vunpack.c.l.b16 %v272
    %v313 = vunpack.c.l.b16 %v273
    %v314 = vunpack.c.l.b16 %v274
    %v315 = vunpack.c.l.b16 %v275
    %v316 = vunpack.c.l.b16 %v276
    %v317 = vunpack.c.l.b16 %v277
    %v318 = vunpack.c.l.b16 %v278
    %v319 = vunpack.c.l.b16 %v279
    %v320 = vunpack.c.l.b16 %v280
    %v321 = vunpack.c.l.b16 %v281
    %v322 = vunpack.c.l.b16 %v282
    %v323 = vunpack.c.l.b16 %v283
    %v324 = vunpack.c.l.b16 %v284
    %v325 = vpack.c.b16 %v310, %v309
    %v326 = vpack.c.b16 %v312, %v311
    %v327 = vpack.c.b16 %v314, %v313
    %v328 = vpack.c.b16 %v316, %v315
    %v329 = vpack.c.b16 %v318, %v317
    %v330 = vpack.c.b16 %v320, %v319
    %v331 = vpack.c.b16 %v322, %v321
    %v332 = vpack.c.b16 %v324, %v323
    %341 = vmatprep.subr.bf16.mxu0 0
    %342 = vmatpush1.bf16.msra.mxu0 %v325
    %343 = vmatprep.subr.bf16.mxu0 0
    %344 = vmatpush1.bf16.msra.mxu0 %v326
    %345 = vmatprep.subr.bf16.mxu0 0
    %346 = vmatpush1.bf16.msra.mxu0 %v327
    %347 = vmatprep.subr.bf16.mxu0 0
    %348 = vmatpush1.bf16.msra.mxu0 %v328
    %349 = vmatprep.subr.bf16.mxu0 0
    %350 = vmatpush1.bf16.msra.mxu0 %v329
    %351 = vmatprep.subr.bf16.mxu0 0
    %352 = vmatpush1.bf16.msra.mxu0 %v330
    %353 = vmatprep.subr.bf16.mxu0 0
    %354 = vmatpush1.bf16.msra.mxu0 %v331
    %355 = vmatprep.subr.bf16.mxu0 0
    %356 = vmatpush1.bf16.msra.mxu0 %v332
    %357 = vmatprep.subr.bf16.mxu0 0
    %358 = vmatpush1.bf16.msra.mxu0 0
    %359 = vmatprep.subr.bf16.mxu0 0
    %360 = vmatpush1.bf16.msra.mxu0 0
    %361 = vmatprep.subr.bf16.mxu0 0
    %362 = vmatpush1.bf16.msra.mxu0 0
    %363 = vmatprep.subr.bf16.mxu0 0
    %364 = vmatpush1.bf16.msra.mxu0 0
    %365 = vmatprep.subr.bf16.mxu0 0
    %366 = vmatpush1.bf16.msra.mxu0 0
    %367 = vmatprep.subr.bf16.mxu0 0
    %368 = vmatpush1.bf16.msra.mxu0 0
    %369 = vmatprep.subr.bf16.mxu0 0
    %370 = vmatpush1.bf16.msra.mxu0 0
    %371 = vmatprep.subr.bf16.mxu0 0
    %372 = vmatpush1.bf16.msra.mxu0 0
    %373 = vmatprep.mubr.bf16.mxu0 0
    %374 = vmatmul.mubr.bf16.gmra.mrb[0].mxu0 %v267
    %v375 = vpop.f32.mrb[0].mxu0
    %v376 = vadd.f32 %v291, %v375
    %v377 = vpop.f32.mrb[0].mxu0
    %v378 = vpop.f32.mrb[0].mxu0
    %v379 = vadd.f32 %v291, %v378
    %v380 = vpop.f32.mrb[0].mxu0
    %381 = vdwg.mxu0
    %v382 = vmax.f32 %v376, 0.0
    %v383 = vmax.f32 %v379, 0.0
    %v384 = vpack.c.bf16 %v383, %v382
    %s385 = scalar_lea.vmem [#allocation7], 128
    %v386 = vld [vmem:[%s385] sm:$0xf]
    %v387 = vld [vmem:[%s385 + $0x4] sm:$0xf]
    %v388 = vld [vmem:[%s385 + $0x8] sm:$0xf]
    %v389 = vld [vmem:[%s385 + $0xc] sm:$0xf]
    %v390 = vld [vmem:[%s385 + $0x10] sm:$0xf]
    %v391 = vld [vmem:[%s385 + $0x14] sm:$0xf]
    %v392 = vld [vmem:[%s385 + $0x18] sm:$0xf]
    %v393 = vld [vmem:[%s385 + $0x1c] sm:$0xf]
    %v394 = vld [vmem:[%s385 + $0x20] sm:$0xf]
    %v395 = vld [vmem:[%s385 + $0x24] sm:$0xf]
    %v396 = vld [vmem:[%s385 + $0x28] sm:$0xf]
    %v397 = vld [vmem:[%s385 + $0x2c] sm:$0xf]
    %v398 = vld [vmem:[%s385 + $0x30] sm:$0xf]
    %v399 = vld [vmem:[%s385 + $0x34] sm:$0xf]
    %v400 = vld [vmem:[%s385 + $0x38] sm:$0xf]
    %v401 = vld [vmem:[%s385 + $0x3c] sm:$0xf]
    %s402 = scalar_lea.vmem %s4, 2
    %v403 = vld [vmem:[%s402] sm:$0x1]
    %v405 = vlaneseq
    %v406 = vshrl.u32 %v405, 7
    %v407 = vsub.s32 0, %v406
    %v408 = vrot.slane %v403, %v407
    %v426 = vunpack.c.l.b16 %v386
    %v427 = vunpack.c.l.b16 %v387
    %v428 = vunpack.c.l.b16 %v388
    %v429 = vunpack.c.l.b16 %v389
    %v430 = vunpack.c.l.b16 %v390
    %v431 = vunpack.c.l.b16 %v391
    %v432 = vunpack.c.l.b16 %v392
    %v433 = vunpack.c.l.b16 %v393
    %v434 = vunpack.c.l.b16 %v394
    %v435 = vunpack.c.l.b16 %v395
    %v436 = vunpack.c.l.b16 %v396
    %v437 = vunpack.c.l.b16 %v397
    %v438 = vunpack.c.l.b16 %v398
    %v439 = vunpack.c.l.b16 %v399
    %v440 = vunpack.c.l.b16 %v400
    %v441 = vunpack.c.l.b16 %v401
    %v442 = vpack.c.b16 %v427, %v426
    %v443 = vpack.c.b16 %v429, %v428
    %v444 = vpack.c.b16 %v431, %v430
    %v445 = vpack.c.b16 %v433, %v432
    %v446 = vpack.c.b16 %v435, %v434
    %v447 = vpack.c.b16 %v437, %v436
    %v448 = vpack.c.b16 %v439, %v438
    %v449 = vpack.c.b16 %v441, %v440
    %458 = vmatprep.subr.bf16.mxu0 0
    %459 = vmatpush1.bf16.msra.mxu0 %v442
    %460 = vmatprep.subr.bf16.mxu0 0
    %461 = vmatpush1.bf16.msra.mxu0 %v443
    %462 = vmatprep.subr.bf16.mxu0 0
    %463 = vmatpush1.bf16.msra.mxu0 %v444
    %464 = vmatprep.subr.bf16.mxu0 0
    %465 = vmatpush1.bf16.msra.mxu0 %v445
    %466 = vmatprep.subr.bf16.mxu0 0
    %467 = vmatpush1.bf16.msra.mxu0 %v446
    %468 = vmatprep.subr.bf16.mxu0 0
    %469 = vmatpush1.bf16.msra.mxu0 %v447
    %470 = vmatprep.subr.bf16.mxu0 0
    %471 = vmatpush1.bf16.msra.mxu0 %v448
    %472 = vmatprep.subr.bf16.mxu0 0
    %473 = vmatpush1.bf16.msra.mxu0 %v449
    %474 = vmatprep.subr.bf16.mxu0 0
    %475 = vmatpush1.bf16.msra.mxu0 0
    %476 = vmatprep.subr.bf16.mxu0 0
    %477 = vmatpush1.bf16.msra.mxu0 0
    %478 = vmatprep.subr.bf16.mxu0 0
    %479 = vmatpush1.bf16.msra.mxu0 0
    %480 = vmatprep.subr.bf16.mxu0 0
    %481 = vmatpush1.bf16.msra.mxu0 0
    %482 = vmatprep.subr.bf16.mxu0 0
    %483 = vmatpush1.bf16.msra.mxu0 0
    %484 = vmatprep.subr.bf16.mxu0 0
    %485 = vmatpush1.bf16.msra.mxu0 0
    %486 = vmatprep.subr.bf16.mxu0 0
    %487 = vmatpush1.bf16.msra.mxu0 0
    %488 = vmatprep.subr.bf16.mxu0 0
    %489 = vmatpush1.bf16.msra.mxu0 0
    %490 = vmatprep.mubr.bf16.mxu0 0
    %491 = vmatmul.mubr.bf16.gmra.mrb[0].mxu0 %v384
    %v492 = vpop.f32.mrb[0].mxu0
    %v493 = vadd.f32 %v408, %v492
    %v494 = vpop.f32.mrb[0].mxu0
    %v495 = vpop.f32.mrb[0].mxu0
    %v496 = vadd.f32 %v408, %v495
    %v497 = vpop.f32.mrb[0].mxu0
    %498 = vdwg.mxu0
    %v499 = vmax.f32 %v493, 0.0
    %v500 = vmax.f32 %v496, 0.0
    %v501 = vpack.c.bf16 %v500, %v499
    %s502 = scalar_lea.vmem [#allocation7], 192
    %v503 = vld [vmem:[%s502] sm:$0xf]
    %v504 = vld [vmem:[%s502 + $0x4] sm:$0xf]
    %v505 = vld [vmem:[%s502 + $0x8] sm:$0xf]
    %v506 = vld [vmem:[%s502 + $0xc] sm:$0xf]
    %v507 = vld [vmem:[%s502 + $0x10] sm:$0xf]
    %v508 = vld [vmem:[%s502 + $0x14] sm:$0xf]
    %v509 = vld [vmem:[%s502 + $0x18] sm:$0xf]
    %v510 = vld [vmem:[%s502 + $0x1c] sm:$0xf]
    %v511 = vld [vmem:[%s502 + $0x20] sm:$0xf]
    %v512 = vld [vmem:[%s502 + $0x24] sm:$0xf]
    %v513 = vld [vmem:[%s502 + $0x28] sm:$0xf]
    %v514 = vld [vmem:[%s502 + $0x2c] sm:$0xf]
    %v515 = vld [vmem:[%s502 + $0x30] sm:$0xf]
    %v516 = vld [vmem:[%s502 + $0x34] sm:$0xf]
    %v517 = vld [vmem:[%s502 + $0x38] sm:$0xf]
    %v518 = vld [vmem:[%s502 + $0x3c] sm:$0xf]
    %s519 = scalar_lea.vmem %s4, 3
    %v520 = vld [vmem:[%s519] sm:$0x1]
    %v522 = vlaneseq
    %v523 = vshrl.u32 %v522, 7
    %v524 = vsub.s32 0, %v523
    %v525 = vrot.slane %v520, %v524
    %v543 = vunpack.c.l.b16 %v503
    %v544 = vunpack.c.l.b16 %v504
    %v545 = vunpack.c.l.b16 %v505
    %v546 = vunpack.c.l.b16 %v506
    %v547 = vunpack.c.l.b16 %v507
    %v548 = vunpack.c.l.b16 %v508
    %v549 = vunpack.c.l.b16 %v509
    %v550 = vunpack.c.l.b16 %v510
    %v551 = vunpack.c.l.b16 %v511
    %v552 = vunpack.c.l.b16 %v512
    %v553 = vunpack.c.l.b16 %v513
    %v554 = vunpack.c.l.b16 %v514
    %v555 = vunpack.c.l.b16 %v515
    %v556 = vunpack.c.l.b16 %v516
    %v557 = vunpack.c.l.b16 %v517
    %v558 = vunpack.c.l.b16 %v518
    %v559 = vpack.c.b16 %v544, %v543
    %v560 = vpack.c.b16 %v546, %v545
    %v561 = vpack.c.b16 %v548, %v547
    %v562 = vpack.c.b16 %v550, %v549
    %v563 = vpack.c.b16 %v552, %v551
    %v564 = vpack.c.b16 %v554, %v553
    %v565 = vpack.c.b16 %v556, %v555
    %v566 = vpack.c.b16 %v558, %v557
    %575 = vmatprep.subr.bf16.mxu0 0
    %576 = vmatpush1.bf16.msra.mxu0 %v559
    %577 = vmatprep.subr.bf16.mxu0 0
    %578 = vmatpush1.bf16.msra.mxu0 %v560
    %579 = vmatprep.subr.bf16.mxu0 0
    %580 = vmatpush1.bf16.msra.mxu0 %v561
    %581 = vmatprep.subr.bf16.mxu0 0
    %582 = vmatpush1.bf16.msra.mxu0 %v562
    %583 = vmatprep.subr.bf16.mxu0 0
    %584 = vmatpush1.bf16.msra.mxu0 %v563
    %585 = vmatprep.subr.bf16.mxu0 0
    %586 = vmatpush1.bf16.msra.mxu0 %v564
    %587 = vmatprep.subr.bf16.mxu0 0
    %588 = vmatpush1.bf16.msra.mxu0 %v565
    %589 = vmatprep.subr.bf16.mxu0 0
    %590 = vmatpush1.bf16.msra.mxu0 %v566
    %591 = vmatprep.subr.bf16.mxu0 0
    %592 = vmatpush1.bf16.msra.mxu0 0
    %593 = vmatprep.subr.bf16.mxu0 0
    %594 = vmatpush1.bf16.msra.mxu0 0
    %595 = vmatprep.subr.bf16.mxu0 0
    %596 = vmatpush1.bf16.msra.mxu0 0
    %597 = vmatprep.subr.bf16.mxu0 0
    %598 = vmatpush1.bf16.msra.mxu0 0
    %599 = vmatprep.subr.bf16.mxu0 0
    %600 = vmatpush1.bf16.msra.mxu0 0
    %601 = vmatprep.subr.bf16.mxu0 0
    %602 = vmatpush1.bf16.msra.mxu0 0
    %603 = vmatprep.subr.bf16.mxu0 0
    %604 = vmatpush1.bf16.msra.mxu0 0
    %605 = vmatprep.subr.bf16.mxu0 0
    %606 = vmatpush1.bf16.msra.mxu0 0
    %607 = vmatprep.mubr.bf16.mxu0 0
    %608 = vmatmul.mubr.bf16.gmra.mrb[0].mxu0 %v501
    %v609 = vpop.f32.mrb[0].mxu0
    %v610 = vadd.f32 %v525, %v609
    %v611 = vpop.f32.mrb[0].mxu0
    %v612 = vpop.f32.mrb[0].mxu0
    %v613 = vadd.f32 %v525, %v612
    %v614 = vpop.f32.mrb[0].mxu0
    %615 = vdwg.mxu0
    %v616 = vmax.f32 %v610, 0.0
    %v617 = vmax.f32 %v613, 0.0
    %v618 = vpack.c.bf16 %v617, %v616
    %v619 = vld [vmem:[#allocation8] sm:$0xf]
    %v620 = vld [vmem:[#allocation8 + $0x4] sm:$0xf]
    %v621 = vld [vmem:[#allocation8 + $0x8] sm:$0xf]
    %v622 = vld [vmem:[#allocation8 + $0xc] sm:$0xf]
    %v623 = vld [vmem:[#allocation8 + $0x10] sm:$0xf]
    %v624 = vld [vmem:[#allocation8 + $0x14] sm:$0xf]
    %v625 = vld [vmem:[#allocation8 + $0x18] sm:$0xf]
    %v626 = vld [vmem:[#allocation8 + $0x1c] sm:$0xf]
    %v627 = vld [vmem:[#allocation8 + $0x20] sm:$0xf]
    %v628 = vld [vmem:[#allocation8 + $0x24] sm:$0xf]
    %v629 = vld [vmem:[#allocation8 + $0x28] sm:$0xf]
    %v630 = vld [vmem:[#allocation8 + $0x2c] sm:$0xf]
    %v631 = vld [vmem:[#allocation8 + $0x30] sm:$0xf]
    %v632 = vld [vmem:[#allocation8 + $0x34] sm:$0xf]
    %v633 = vld [vmem:[#allocation8 + $0x38] sm:$0xf]
    %v634 = vld [vmem:[#allocation8 + $0x3c] sm:$0xf]
    %v635 = vld [vmem:[%s6] sm:$0x1]
    %v637 = vlaneseq
    %v638 = vshrl.u32 %v637, 7
    %v639 = vsub.s32 0, %v638
    %v640 = vrot.slane %v635, %v639
    %v658 = vunpack.c.l.b16 %v619
    %v659 = vunpack.c.l.b16 %v620
    %v660 = vunpack.c.l.b16 %v621
    %v661 = vunpack.c.l.b16 %v622
    %v662 = vunpack.c.l.b16 %v623
    %v663 = vunpack.c.l.b16 %v624
    %v664 = vunpack.c.l.b16 %v625
    %v665 = vunpack.c.l.b16 %v626
    %v666 = vunpack.c.l.b16 %v627
    %v667 = vunpack.c.l.b16 %v628
    %v668 = vunpack.c.l.b16 %v629
    %v669 = vunpack.c.l.b16 %v630
    %v670 = vunpack.c.l.b16 %v631
    %v671 = vunpack.c.l.b16 %v632
    %v672 = vunpack.c.l.b16 %v633
    %v673 = vunpack.c.l.b16 %v634
    %v674 = vpack.c.b16 %v659, %v658
    %v675 = vpack.c.b16 %v661, %v660
    %v676 = vpack.c.b16 %v663, %v662
    %v677 = vpack.c.b16 %v665, %v664
    %v678 = vpack.c.b16 %v667, %v666
    %v679 = vpack.c.b16 %v669, %v668
    %v680 = vpack.c.b16 %v671, %v670
    %v681 = vpack.c.b16 %v673, %v672
    %690 = vmatprep.subr.bf16.mxu0 0
    %691 = vmatpush1.bf16.msra.mxu0 %v674
    %692 = vmatprep.subr.bf16.mxu0 0
    %693 = vmatpush1.bf16.msra.mxu0 %v675
    %694 = vmatprep.subr.bf16.mxu0 0
    %695 = vmatpush1.bf16.msra.mxu0 %v676
    %696 = vmatprep.subr.bf16.mxu0 0
    %697 = vmatpush1.bf16.msra.mxu0 %v677
    %698 = vmatprep.subr.bf16.mxu0 0
    %699 = vmatpush1.bf16.msra.mxu0 %v678
    %700 = vmatprep.subr.bf16.mxu0 0
    %701 = vmatpush1.bf16.msra.mxu0 %v679
    %702 = vmatprep.subr.bf16.mxu0 0
    %703 = vmatpush1.bf16.msra.mxu0 %v680
    %704 = vmatprep.subr.bf16.mxu0 0
    %705 = vmatpush1.bf16.msra.mxu0 %v681
    %706 = vmatprep.subr.bf16.mxu0 0
    %707 = vmatpush1.bf16.msra.mxu0 0
    %708 = vmatprep.subr.bf16.mxu0 0
    %709 = vmatpush1.bf16.msra.mxu0 0
    %710 = vmatprep.subr.bf16.mxu0 0
    %711 = vmatpush1.bf16.msra.mxu0 0
    %712 = vmatprep.subr.bf16.mxu0 0
    %713 = vmatpush1.bf16.msra.mxu0 0
    %714 = vmatprep.subr.bf16.mxu0 0
    %715 = vmatpush1.bf16.msra.mxu0 0
    %716 = vmatprep.subr.bf16.mxu0 0
    %717 = vmatpush1.bf16.msra.mxu0 0
    %718 = vmatprep.subr.bf16.mxu0 0
    %719 = vmatpush1.bf16.msra.mxu0 0
    %720 = vmatprep.subr.bf16.mxu0 0
    %721 = vmatpush1.bf16.msra.mxu0 0
    %722 = vmatprep.mubr.bf16.mxu0 0
    %723 = vmatmul.mubr.bf16.gmra.mrb[0].mxu0 %v618
    %v724 = vpop.f32.mrb[0].mxu0
    %v725 = vadd.f32 %v640, %v724
    %v726 = vpop.f32.mrb[0].mxu0
    %v727 = vpop.f32.mrb[0].mxu0
    %v728 = vadd.f32 %v640, %v727
    %v729 = vpop.f32.mrb[0].mxu0
    %730 = vdwg.mxu0
    %731 = vst [vmem:[#allocation10] sm:$0xff] %v725
    %732 = vst [vmem:[#allocation10 + $0x8] sm:$0xff] %v728
    // Predicated region
    $region46: #{tpu_custom_call.1} parent=1 // pred_check
      _
    $region47: #{tpu_custom_call.1} parent=1 // pred_check_branch
      %734 = sbr.rel (0) target = $region49
    $region48: #{tpu_custom_call.1} parent=1 // pred_region
      %s736 = ssub.s32 256, 256
      %737 = vsyncadd [#allocation4], %s736
      %s738 = sshll.u32 [#allocation10], 4
      %s739 = int_to_ptr.vmem [resolvable:$true] %s738
      %744 = dma.vmem_to_hbm [thread:$0]  %s739, 256, %s7, [#allocation4], 128, 128, 8
    $region49: #{tpu_custom_call.1} parent=1 // pred_fallthru
      _
    // Predicated region
    $region50: #{tpu_custom_call.1} parent=1 // pred_check
      _
    $region51: #{tpu_custom_call.1} parent=1 // pred_check_branch
      %746 = sbr.rel (0) target = $region53
    $region52: #{tpu_custom_call.1} parent=1 // pred_region
      %747 = dma.done [#allocation4], 256
    $region53: #{tpu_custom_call.1} parent=1 // pred_fallthru
      _
    %748 = vsyncpa [#allocation3], 1
    %749 = vsyncpa [#allocation6], 1
    %750 = vsyncpa [#allocation9], 1
    %751 = vsyncpa [#allocation4], 1

// kernel: tpu_custom_call.1
$region0: #{tpu_custom_call.1}
  #allocation0 [shape = 'u32[]', space=smem, size = 0x4, offset = 0x4, fixed_abs, tag = 'smem constant byte address 0x4 - core index']
  #allocation1 [shape = 'u32[144,128]{1,0:T(1,128)}', space=vmem, size = 0x12000, scoped, tag = 'internal scratch']
  %s0 = inlined_call_operand.hbm [shape: bf16[16,16], index: 0, kind: input, shape index: {}]
  %s1 = inlined_call_operand.hbm [shape: bf16[16,128], index: 1, kind: input, shape index: {}]
  %s2 = inlined_call_operand.vmem [shape: f32[1,128], index: 2, kind: input, shape index: {}]
  %s3 = inlined_call_operand.hbm [shape: bf16[4,128,128], index: 3, kind: input, shape index: {}]
  %s4 = inlined_call_operand.vmem [shape: f32[4,1,128], index: 4, kind: input, shape index: {}]
  %s5 = inlined_call_operand.hbm [shape: bf16[128,128], index: 5, kind: input, shape index: {}]
  %s6 = inlined_call_operand.vmem [shape: f32[1,128], index: 6, kind: input, shape index: {}]
  %s7 = inlined_call_operand.hbm [shape: f32[16,128], index: 7, kind: output, shape index: {}]
  %s8 = sld [smem:[#allocation0]]
  $region54: #{tpu_custom_call.1} parent=0
    _
  %s10 = ssub.s32 1, %s8
  %s11 = scalar_select 0, %s10, %s8
  $region1: #{tpu_custom_call.1} parent=0
    #allocation2 [shape = 'u8[4096]{0}', space=vmem, size = 0x1000, scoped, tag = 'input window, operand 0, single buffered']
    #allocation3 [shape = 's32[1]{0}', space=sflag, size = 0x4, scoped, tag = 'scoped memory for tpu_custom_call.1']
    #allocation4 [shape = 's32[1]{0}', space=sflag, size = 0x4, scoped, tag = 'scoped memory for tpu_custom_call.1']
    #allocation5 [shape = 'u8[4096]{0}', space=vmem, size = 0x1000, scoped, tag = 'input window, operand 1, single buffered']
    #allocation6 [shape = 's32[1]{0}', space=sflag, size = 0x4, scoped, tag = 'scoped memory for tpu_custom_call.1']
    #allocation7 [shape = 'u8[131072]{0}', space=vmem, size = 0x20000, scoped, tag = 'input window, operand 3, single buffered']
    #allocation8 [shape = 'u8[32768]{0}', space=vmem, size = 0x8000, scoped, tag = 'input window, operand 5, single buffered']
    #allocation9 [shape = 's32[1]{0}', space=sflag, size = 0x4, scoped, tag = 'scoped memory for tpu_custom_call.1']
    #allocation10 [shape = 'u8[8192]{0}', space=vmem, size = 0x2000, scoped, tag = 'output window, operand 0, single buffered']
    %12 = vsyncpa [#allocation3], 0
    %13 = vsyncpa [#allocation6], 0
    %14 = vsyncpa [#allocation9], 0
    %15 = vsyncpa [#allocation4], 0
    // Predicated region
    $region2: #{tpu_custom_call.1} parent=1 // pred_check
      _
    $region3: #{tpu_custom_call.1} parent=1 // pred_check_branch
      %17 = sbr.rel (0) target = $region5
    $region4: #{tpu_custom_call.1} parent=1 // pred_region
      %s19 = ssub.s32 128, 128
      %20 = vsyncadd [#allocation3], %s19
      %s21 = sshll.u32 [#allocation2], 4
      %s22 = int_to_ptr.vmem [resolvable:$true] %s21
      %27 = dma.hbm_to_vmem [thread:$0]  %s0, 128, %s22, [#allocation3], 64, 64, 4
    $region5: #{tpu_custom_call.1} parent=1 // pred_fallthru
      _
    // Predicated region
    $region6: #{tpu_custom_call.1} parent=1 // pred_check
      _
    $region7: #{tpu_custom_call.1} parent=1 // pred_check_branch
      %29 = sbr.rel (0) target = $region9
    $region8: #{tpu_custom_call.1} parent=1 // pred_region
      %s31 = ssub.s32 128, 128
      %32 = vsyncadd [#allocation6], %s31
      %s33 = sshll.u32 [#allocation5], 4
      %s34 = int_to_ptr.vmem [resolvable:$true] %s33
      %39 = dma.hbm_to_vmem [thread:$0]  %s1, 128, %s34, [#allocation6], 64, 64, 4
    $region9: #{tpu_custom_call.1} parent=1 // pred_fallthru
      _
    // Predicated region
    $region10: #{tpu_custom_call.1} parent=1 // pred_check
      _
    $region11: #{tpu_custom_call.1} parent=1 // pred_check_branch
      %41 = sbr.rel (0) target = $region13
    $region12: #{tpu_custom_call.1} parent=1 // pred_region
      _
    $region13: #{tpu_custom_call.1} parent=1 // pred_fallthru
      _
    // Predicated region
    $region14: #{tpu_custom_call.1} parent=1 // pred_check
      _
    $region15: #{tpu_custom_call.1} parent=1 // pred_check_branch
      %43 = sbr.rel (0) target = $region17
    $region16: #{tpu_custom_call.1} parent=1 // pred_region
      %s45 = ssub.s32 4096, 4096
      %46 = vsyncadd [#allocation6], %s45
      %s47 = sshll.u32 [#allocation7], 4
      %s48 = int_to_ptr.vmem [resolvable:$true] %s47
      %53 = dma.hbm_to_vmem [thread:$0]  %s3, 4096, %s48, [#allocation6], 64, 64, 4
    $region17: #{tpu_custom_call.1} parent=1 // pred_fallthru
      _
    // Predicated region
    $region18: #{tpu_custom_call.1} parent=1 // pred_check
      _
    $region19: #{tpu_custom_call.1} parent=1 // pred_check_branch
      %55 = sbr.rel (0) target = $region21
    $region20: #{tpu_custom_call.1} parent=1 // pred_region
      _
    $region21: #{tpu_custom_call.1} parent=1 // pred_fallthru
      _
    // Predicated region
    $region22: #{tpu_custom_call.1} parent=1 // pred_check
      _
    $region23: #{tpu_custom_call.1} parent=1 // pred_check_branch
      %57 = sbr.rel (0) target = $region25
    $region24: #{tpu_custom_call.1} parent=1 // pred_region
      %s59 = ssub.s32 1024, 1024
      %60 = vsyncadd [#allocation9], %s59
      %s61 = sshll.u32 [#allocation8], 4
      %s62 = int_to_ptr.vmem [resolvable:$true] %s61
      %67 = dma.hbm_to_vmem [thread:$0]  %s5, 1024, %s62, [#allocation9], 64, 64, 4
    $region25: #{tpu_custom_call.1} parent=1 // pred_fallthru
      _
    // Predicated region
    $region26: #{tpu_custom_call.1} parent=1 // pred_check
      _
    $region27: #{tpu_custom_call.1} parent=1 // pred_check_branch
      %69 = sbr.rel (0) target = $region29
    $region28: #{tpu_custom_call.1} parent=1 // pred_region
      _
    $region29: #{tpu_custom_call.1} parent=1 // pred_fallthru
      _
    // Predicated region
    $region30: #{tpu_custom_call.1} parent=1 // pred_check
      _
    $region31: #{tpu_custom_call.1} parent=1 // pred_check_branch
      %71 = sbr.rel (0) target = $region33
    $region32: #{tpu_custom_call.1} parent=1 // pred_region
      %72 = dma.done [#allocation3], 128
    $region33: #{tpu_custom_call.1} parent=1 // pred_fallthru
      _
    // Predicated region
    $region34: #{tpu_custom_call.1} parent=1 // pred_check
      _
    $region35: #{tpu_custom_call.1} parent=1 // pred_check_branch
      %74 = sbr.rel (0) target = $region37
    $region36: #{tpu_custom_call.1} parent=1 // pred_region
      %75 = dma.done [#allocation6], 128
    $region37: #{tpu_custom_call.1} parent=1 // pred_fallthru
      _
    // Predicated region
    $region38: #{tpu_custom_call.1} parent=1 // pred_check
      _
    $region39: #{tpu_custom_call.1} parent=1 // pred_check_branch
      %77 = sbr.rel (0) target = $region41
    $region40: #{tpu_custom_call.1} parent=1 // pred_region
      %78 = dma.done [#allocation6], 4096
    $region41: #{tpu_custom_call.1} parent=1 // pred_fallthru
      _
    // Predicated region
    $region42: #{tpu_custom_call.1} parent=1 // pred_check
      _
    $region43: #{tpu_custom_call.1} parent=1 // pred_check_branch
      %80 = sbr.rel (0) target = $region45
    $region44: #{tpu_custom_call.1} parent=1 // pred_region
      %81 = dma.done [#allocation9], 1024
    $region45: #{tpu_custom_call.1} parent=1 // pred_fallthru
      _
    %v83 = vld [vmem:[#allocation2] sm:$0xf]
    %v84 = vld [vmem:[#allocation2 + $0x4] sm:$0xf]
    %v85 = vld [vmem:[#allocation5] sm:$0xf]
    %v86 = vld [vmem:[#allocation5 + $0x4] sm:$0xf]
    %v87 = vld [vmem:[%s2] sm:$0x1]
    %v89 = vlaneseq
    %v90 = vshrl.u32 %v89, 7
    %v91 = vsub.s32 0, %v90
    %v92 = vrot.slane %v87, %v91
    %v96 = vunpack.c.l.b16 %v83
    %v97 = vunpack.c.l.b16 %v84
    %v98 = vpack.c.b16 %v97, %v96
    %v101 = vunpack.c.l.b16 %v85
    %v102 = vunpack.c.l.b16 %v86
    %v103 = vpack.c.b16 %v102, %v101
    %vm105 = vcmask 130048
    %v107 = vsel %vm105, %v98, 0
    %109 = vmatprep.subr.bf16.mxu0 0
    %110 = vmatpush1.bf16.msra.mxu0 %v103
    %111 = vmatprep.subr.bf16.mxu0 0
    %112 = vmatpush1.bf16.msra.mxu0 0
    %113 = vmatprep.subr.bf16.mxu0 0
    %114 = vmatpush1.bf16.msra.mxu0 0
    %115 = vmatprep.subr.bf16.mxu0 0
    %116 = vmatpush1.bf16.msra.mxu0 0
    %117 = vmatprep.subr.bf16.mxu0 0
    %118 = vmatpush1.bf16.msra.mxu0 0
    %119 = vmatprep.subr.bf16.mxu0 0
    %120 = vmatpush1.bf16.msra.mxu0 0
    %121 = vmatprep.subr.bf16.mxu0 0
    %122 = vmatpush1.bf16.msra.mxu0 0
    %123 = vmatprep.subr.bf16.mxu0 0
    %124 = vmatpush1.bf16.msra.mxu0 0
    %125 = vmatprep.subr.bf16.mxu0 0
    %126 = vmatpush1.bf16.msra.mxu0 0
    %127 = vmatprep.subr.bf16.mxu0 0
    %128 = vmatpush1.bf16.msra.mxu0 0
    %129 = vmatprep.subr.bf16.mxu0 0
    %130 = vmatpush1.bf16.msra.mxu0 0
    %131 = vmatprep.subr.bf16.mxu0 0
    %132 = vmatpush1.bf16.msra.mxu0 0
    %133 = vmatprep.subr.bf16.mxu0 0
    %134 = vmatpush1.bf16.msra.mxu0 0
    %135 = vmatprep.subr.bf16.mxu0 0
    %136 = vmatpush1.bf16.msra.mxu0 0
    %137 = vmatprep.subr.bf16.mxu0 0
    %138 = vmatpush1.bf16.msra.mxu0 0
    %139 = vmatprep.subr.bf16.mxu0 0
    %140 = vmatpush1.bf16.msra.mxu0 0
    %141 = vmatprep.mubr.bf16.mxu0 0
    %142 = vmatmul.mubr.bf16.gmra.mrb[0].mxu0 %v107
    %v143 = vpop.f32.mrb[0].mxu0
    %v144 = vadd.f32 %v92, %v143
    %v145 = vpop.f32.mrb[0].mxu0
    %v146 = vpop.f32.mrb[0].mxu0
    %v147 = vadd.f32 %v92, %v146
    %v148 = vpop.f32.mrb[0].mxu0
    %149 = vdwg.mxu0
    %v150 = vmax.f32 %v144, 0.0
    %v151 = vmax.f32 %v147, 0.0
    %v152 = vpack.c.bf16 %v151, %v150
    %v153 = vld [vmem:[#allocation7] sm:$0xf]
    %v154 = vld [vmem:[#allocation7 + $0x4] sm:$0xf]
    %v155 = vld [vmem:[#allocation7 + $0x8] sm:$0xf]
    %v156 = vld [vmem:[#allocation7 + $0xc] sm:$0xf]
    %v157 = vld [vmem:[#allocation7 + $0x10] sm:$0xf]
    %v158 = vld [vmem:[#allocation7 + $0x14] sm:$0xf]
    %v159 = vld [vmem:[#allocation7 + $0x18] sm:$0xf]
    %v160 = vld [vmem:[#allocation7 + $0x1c] sm:$0xf]
    %v161 = vld [vmem:[#allocation7 + $0x20] sm:$0xf]
    %v162 = vld [vmem:[#allocation7 + $0x24] sm:$0xf]
    %v163 = vld [vmem:[#allocation7 + $0x28] sm:$0xf]
    %v164 = vld [vmem:[#allocation7 + $0x2c] sm:$0xf]
    %v165 = vld [vmem:[#allocation7 + $0x30] sm:$0xf]
    %v166 = vld [vmem:[#allocation7 + $0x34] sm:$0xf]
    %v167 = vld [vmem:[#allocation7 + $0x38] sm:$0xf]
    %v168 = vld [vmem:[#allocation7 + $0x3c] sm:$0xf]
    %v169 = vld [vmem:[%s4] sm:$0x1]
    %v171 = vlaneseq
    %v172 = vshrl.u32 %v171, 7
    %v173 = vsub.s32 0, %v172
    %v174 = vrot.slane %v169, %v173
    %v192 = vunpack.c.l.b16 %v153
    %v193 = vunpack.c.l.b16 %v154
    %v194 = vunpack.c.l.b16 %v155
    %v195 = vunpack.c.l.b16 %v156
    %v196 = vunpack.c.l.b16 %v157
    %v197 = vunpack.c.l.b16 %v158
    %v198 = vunpack.c.l.b16 %v159
    %v199 = vunpack.c.l.b16 %v160
    %v200 = vunpack.c.l.b16 %v161
    %v201 = vunpack.c.l.b16 %v162
    %v202 = vunpack.c.l.b16 %v163
    %v203 = vunpack.c.l.b16 %v164
    %v204 = vunpack.c.l.b16 %v165
    %v205 = vunpack.c.l.b16 %v166
    %v206 = vunpack.c.l.b16 %v167
    %v207 = vunpack.c.l.b16 %v168
    %v208 = vpack.c.b16 %v193, %v192
    %v209 = vpack.c.b16 %v195, %v194
    %v210 = vpack.c.b16 %v197, %v196
    %v211 = vpack.c.b16 %v199, %v198
    %v212 = vpack.c.b16 %v201, %v200
    %v213 = vpack.c.b16 %v203, %v202
    %v214 = vpack.c.b16 %v205, %v204
    %v215 = vpack.c.b16 %v207, %v206
    %224 = vmatprep.subr.bf16.mxu0 0
    %225 = vmatpush1.bf16.msra.mxu0 %v208
    %226 = vmatprep.subr.bf16.mxu0 0
    %227 = vmatpush1.bf16.msra.mxu0 %v209
    %228 = vmatprep.subr.bf16.mxu0 0
    %229 = vmatpush1.bf16.msra.mxu0 %v210
    %230 = vmatprep.subr.bf16.mxu0 0
    %231 = vmatpush1.bf16.msra.mxu0 %v211
    %232 = vmatprep.subr.bf16.mxu0 0
    %233 = vmatpush1.bf16.msra.mxu0 %v212
    %234 = vmatprep.subr.bf16.mxu0 0
    %235 = vmatpush1.bf16.msra.mxu0 %v213
    %236 = vmatprep.subr.bf16.mxu0 0
    %237 = vmatpush1.bf16.msra.mxu0 %v214
    %238 = vmatprep.subr.bf16.mxu0 0
    %239 = vmatpush1.bf16.msra.mxu0 %v215
    %240 = vmatprep.subr.bf16.mxu0 0
    %241 = vmatpush1.bf16.msra.mxu0 0
    %242 = vmatprep.subr.bf16.mxu0 0
    %243 = vmatpush1.bf16.msra.mxu0 0
    %244 = vmatprep.subr.bf16.mxu0 0
    %245 = vmatpush1.bf16.msra.mxu0 0
    %246 = vmatprep.subr.bf16.mxu0 0
    %247 = vmatpush1.bf16.msra.mxu0 0
    %248 = vmatprep.subr.bf16.mxu0 0
    %249 = vmatpush1.bf16.msra.mxu0 0
    %250 = vmatprep.subr.bf16.mxu0 0
    %251 = vmatpush1.bf16.msra.mxu0 0
    %252 = vmatprep.subr.bf16.mxu0 0
    %253 = vmatpush1.bf16.msra.mxu0 0
    %254 = vmatprep.subr.bf16.mxu0 0
    %255 = vmatpush1.bf16.msra.mxu0 0
    %256 = vmatprep.mubr.bf16.mxu0 0
    %257 = vmatmul.mubr.bf16.gmra.mrb[0].mxu0 %v152
    %v258 = vpop.f32.mrb[0].mxu0
    %v259 = vadd.f32 %v174, %v258
    %v260 = vpop.f32.mrb[0].mxu0
    %v261 = vpop.f32.mrb[0].mxu0
    %v262 = vadd.f32 %v174, %v261
    %v263 = vpop.f32.mrb[0].mxu0
    %264 = vdwg.mxu0
    %v265 = vmax.f32 %v259, 0.0
    %v266 = vmax.f32 %v262, 0.0
    %v267 = vpack.c.bf16 %v266, %v265
    %s268 = scalar_lea.vmem [#allocation7], 64
    %v269 = vld [vmem:[%s268] sm:$0xf]
    %v270 = vld [vmem:[%s268 + $0x4] sm:$0xf]
    %v271 = vld [vmem:[%s268 + $0x8] sm:$0xf]
    %v272 = vld [vmem:[%s268 + $0xc] sm:$0xf]
    %v273 = vld [vmem:[%s268 + $0x10] sm:$0xf]
    %v274 = vld [vmem:[%s268 + $0x14] sm:$0xf]
    %v275 = vld [vmem:[%s268 + $0x18] sm:$0xf]
    %v276 = vld [vmem:[%s268 + $0x1c] sm:$0xf]
    %v277 = vld [vmem:[%s268 + $0x20] sm:$0xf]
    %v278 = vld [vmem:[%s268 + $0x24] sm:$0xf]
    %v279 = vld [vmem:[%s268 + $0x28] sm:$0xf]
    %v280 = vld [vmem:[%s268 + $0x2c] sm:$0xf]
    %v281 = vld [vmem:[%s268 + $0x30] sm:$0xf]
    %v282 = vld [vmem:[%s268 + $0x34] sm:$0xf]
    %v283 = vld [vmem:[%s268 + $0x38] sm:$0xf]
    %v284 = vld [vmem:[%s268 + $0x3c] sm:$0xf]
    %s285 = scalar_lea.vmem %s4, 1
    %v286 = vld [vmem:[%s285] sm:$0x1]
    %v288 = vlaneseq
    %v289 = vshrl.u32 %v288, 7
    %v290 = vsub.s32 0, %v289
    %v291 = vrot.slane %v286, %v290
    %v309 = vunpack.c.l.b16 %v269
    %v310 = vunpack.c.l.b16 %v270
    %v311 = vunpack.c.l.b16 %v271
    %v312 = vunpack.c.l.b16 %v272
    %v313 = vunpack.c.l.b16 %v273
    %v314 = vunpack.c.l.b16 %v274
    %v315 = vunpack.c.l.b16 %v275
    %v316 = vunpack.c.l.b16 %v276
    %v317 = vunpack.c.l.b16 %v277
    %v318 = vunpack.c.l.b16 %v278
    %v319 = vunpack.c.l.b16 %v279
    %v320 = vunpack.c.l.b16 %v280
    %v321 = vunpack.c.l.b16 %v281
    %v322 = vunpack.c.l.b16 %v282
    %v323 = vunpack.c.l.b16 %v283
    %v324 = vunpack.c.l.b16 %v284
    %v325 = vpack.c.b16 %v310, %v309
    %v326 = vpack.c.b16 %v312, %v311
    %v327 = vpack.c.b16 %v314, %v313
    %v328 = vpack.c.b16 %v316, %v315
    %v329 = vpack.c.b16 %v318, %v317
    %v330 = vpack.c.b16 %v320, %v319
    %v331 = vpack.c.b16 %v322, %v321
    %v332 = vpack.c.b16 %v324, %v323
    %341 = vmatprep.subr.bf16.mxu0 0
    %342 = vmatpush1.bf16.msra.mxu0 %v325
    %343 = vmatprep.subr.bf16.mxu0 0
    %344 = vmatpush1.bf16.msra.mxu0 %v326
    %345 = vmatprep.subr.bf16.mxu0 0
    %346 = vmatpush1.bf16.msra.mxu0 %v327
    %347 = vmatprep.subr.bf16.mxu0 0
    %348 = vmatpush1.bf16.msra.mxu0 %v328
    %349 = vmatprep.subr.bf16.mxu0 0
    %350 = vmatpush1.bf16.msra.mxu0 %v329
    %351 = vmatprep.subr.bf16.mxu0 0
    %352 = vmatpush1.bf16.msra.mxu0 %v330
    %353 = vmatprep.subr.bf16.mxu0 0
    %354 = vmatpush1.bf16.msra.mxu0 %v331
    %355 = vmatprep.subr.bf16.mxu0 0
    %356 = vmatpush1.bf16.msra.mxu0 %v332
    %357 = vmatprep.subr.bf16.mxu0 0
    %358 = vmatpush1.bf16.msra.mxu0 0
    %359 = vmatprep.subr.bf16.mxu0 0
    %360 = vmatpush1.bf16.msra.mxu0 0
    %361 = vmatprep.subr.bf16.mxu0 0
    %362 = vmatpush1.bf16.msra.mxu0 0
    %363 = vmatprep.subr.bf16.mxu0 0
    %364 = vmatpush1.bf16.msra.mxu0 0
    %365 = vmatprep.subr.bf16.mxu0 0
    %366 = vmatpush1.bf16.msra.mxu0 0
    %367 = vmatprep.subr.bf16.mxu0 0
    %368 = vmatpush1.bf16.msra.mxu0 0
    %369 = vmatprep.subr.bf16.mxu0 0
    %370 = vmatpush1.bf16.msra.mxu0 0
    %371 = vmatprep.subr.bf16.mxu0 0
    %372 = vmatpush1.bf16.msra.mxu0 0
    %373 = vmatprep.mubr.bf16.mxu0 0
    %374 = vmatmul.mubr.bf16.gmra.mrb[0].mxu0 %v267
    %v375 = vpop.f32.mrb[0].mxu0
    %v376 = vadd.f32 %v291, %v375
    %v377 = vpop.f32.mrb[0].mxu0
    %v378 = vpop.f32.mrb[0].mxu0
    %v379 = vadd.f32 %v291, %v378
    %v380 = vpop.f32.mrb[0].mxu0
    %381 = vdwg.mxu0
    %v382 = vmax.f32 %v376, 0.0
    %v383 = vmax.f32 %v379, 0.0
    %v384 = vpack.c.bf16 %v383, %v382
    %s385 = scalar_lea.vmem [#allocation7], 128
    %v386 = vld [vmem:[%s385] sm:$0xf]
    %v387 = vld [vmem:[%s385 + $0x4] sm:$0xf]
    %v388 = vld [vmem:[%s385 + $0x8] sm:$0xf]
    %v389 = vld [vmem:[%s385 + $0xc] sm:$0xf]
    %v390 = vld [vmem:[%s385 + $0x10] sm:$0xf]
    %v391 = vld [vmem:[%s385 + $0x14] sm:$0xf]
    %v392 = vld [vmem:[%s385 + $0x18] sm:$0xf]
    %v393 = vld [vmem:[%s385 + $0x1c] sm:$0xf]
    %v394 = vld [vmem:[%s385 + $0x20] sm:$0xf]
    %v395 = vld [vmem:[%s385 + $0x24] sm:$0xf]
    %v396 = vld [vmem:[%s385 + $0x28] sm:$0xf]
    %v397 = vld [vmem:[%s385 + $0x2c] sm:$0xf]
    %v398 = vld [vmem:[%s385 + $0x30] sm:$0xf]
    %v399 = vld [vmem:[%s385 + $0x34] sm:$0xf]
    %v400 = vld [vmem:[%s385 + $0x38] sm:$0xf]
    %v401 = vld [vmem:[%s385 + $0x3c] sm:$0xf]
    %s402 = scalar_lea.vmem %s4, 2
    %v403 = vld [vmem:[%s402] sm:$0x1]
    %v405 = vlaneseq
    %v406 = vshrl.u32 %v405, 7
    %v407 = vsub.s32 0, %v406
    %v408 = vrot.slane %v403, %v407
    %v426 = vunpack.c.l.b16 %v386
    %v427 = vunpack.c.l.b16 %v387
    %v428 = vunpack.c.l.b16 %v388
    %v429 = vunpack.c.l.b16 %v389
    %v430 = vunpack.c.l.b16 %v390
    %v431 = vunpack.c.l.b16 %v391
    %v432 = vunpack.c.l.b16 %v392
    %v433 = vunpack.c.l.b16 %v393
    %v434 = vunpack.c.l.b16 %v394
    %v435 = vunpack.c.l.b16 %v395
    %v436 = vunpack.c.l.b16 %v396
    %v437 = vunpack.c.l.b16 %v397
    %v438 = vunpack.c.l.b16 %v398
    %v439 = vunpack.c.l.b16 %v399
    %v440 = vunpack.c.l.b16 %v400
    %v441 = vunpack.c.l.b16 %v401
    %v442 = vpack.c.b16 %v427, %v426
    %v443 = vpack.c.b16 %v429, %v428
    %v444 = vpack.c.b16 %v431, %v430
    %v445 = vpack.c.b16 %v433, %v432
    %v446 = vpack.c.b16 %v435, %v434
    %v447 = vpack.c.b16 %v437, %v436
    %v448 = vpack.c.b16 %v439, %v438
    %v449 = vpack.c.b16 %v441, %v440
    %458 = vmatprep.subr.bf16.mxu0 0
    %459 = vmatpush1.bf16.msra.mxu0 %v442
    %460 = vmatprep.subr.bf16.mxu0 0
    %461 = vmatpush1.bf16.msra.mxu0 %v443
    %462 = vmatprep.subr.bf16.mxu0 0
    %463 = vmatpush1.bf16.msra.mxu0 %v444
    %464 = vmatprep.subr.bf16.mxu0 0
    %465 = vmatpush1.bf16.msra.mxu0 %v445
    %466 = vmatprep.subr.bf16.mxu0 0
    %467 = vmatpush1.bf16.msra.mxu0 %v446
    %468 = vmatprep.subr.bf16.mxu0 0
    %469 = vmatpush1.bf16.msra.mxu0 %v447
    %470 = vmatprep.subr.bf16.mxu0 0
    %471 = vmatpush1.bf16.msra.mxu0 %v448
    %472 = vmatprep.subr.bf16.mxu0 0
    %473 = vmatpush1.bf16.msra.mxu0 %v449
    %474 = vmatprep.subr.bf16.mxu0 0
    %475 = vmatpush1.bf16.msra.mxu0 0
    %476 = vmatprep.subr.bf16.mxu0 0
    %477 = vmatpush1.bf16.msra.mxu0 0
    %478 = vmatprep.subr.bf16.mxu0 0
    %479 = vmatpush1.bf16.msra.mxu0 0
    %480 = vmatprep.subr.bf16.mxu0 0
    %481 = vmatpush1.bf16.msra.mxu0 0
    %482 = vmatprep.subr.bf16.mxu0 0
    %483 = vmatpush1.bf16.msra.mxu0 0
    %484 = vmatprep.subr.bf16.mxu0 0
    %485 = vmatpush1.bf16.msra.mxu0 0
    %486 = vmatprep.subr.bf16.mxu0 0
    %487 = vmatpush1.bf16.msra.mxu0 0
    %488 = vmatprep.subr.bf16.mxu0 0
    %489 = vmatpush1.bf16.msra.mxu0 0
    %490 = vmatprep.mubr.bf16.mxu0 0
    %491 = vmatmul.mubr.bf16.gmra.mrb[0].mxu0 %v384
    %v492 = vpop.f32.mrb[0].mxu0
    %v493 = vadd.f32 %v408, %v492
    %v494 = vpop.f32.mrb[0].mxu0
    %v495 = vpop.f32.mrb[0].mxu0
    %v496 = vadd.f32 %v408, %v495
    %v497 = vpop.f32.mrb[0].mxu0
    %498 = vdwg.mxu0
    %v499 = vmax.f32 %v493, 0.0
    %v500 = vmax.f32 %v496, 0.0
    %v501 = vpack.c.bf16 %v500, %v499
    %s502 = scalar_lea.vmem [#allocation7], 192
    %v503 = vld [vmem:[%s502] sm:$0xf]
    %v504 = vld [vmem:[%s502 + $0x4] sm:$0xf]
    %v505 = vld [vmem:[%s502 + $0x8] sm:$0xf]
    %v506 = vld [vmem:[%s502 + $0xc] sm:$0xf]
    %v507 = vld [vmem:[%s502 + $0x10] sm:$0xf]
    %v508 = vld [vmem:[%s502 + $0x14] sm:$0xf]
    %v509 = vld [vmem:[%s502 + $0x18] sm:$0xf]
    %v510 = vld [vmem:[%s502 + $0x1c] sm:$0xf]
    %v511 = vld [vmem:[%s502 + $0x20] sm:$0xf]
    %v512 = vld [vmem:[%s502 + $0x24] sm:$0xf]
    %v513 = vld [vmem:[%s502 + $0x28] sm:$0xf]
    %v514 = vld [vmem:[%s502 + $0x2c] sm:$0xf]
    %v515 = vld [vmem:[%s502 + $0x30] sm:$0xf]
    %v516 = vld [vmem:[%s502 + $0x34] sm:$0xf]
    %v517 = vld [vmem:[%s502 + $0x38] sm:$0xf]
    %v518 = vld [vmem:[%s502 + $0x3c] sm:$0xf]
    %s519 = scalar_lea.vmem %s4, 3
    %v520 = vld [vmem:[%s519] sm:$0x1]
    %v522 = vlaneseq
    %v523 = vshrl.u32 %v522, 7
    %v524 = vsub.s32 0, %v523
    %v525 = vrot.slane %v520, %v524
    %v543 = vunpack.c.l.b16 %v503
    %v544 = vunpack.c.l.b16 %v504
    %v545 = vunpack.c.l.b16 %v505
    %v546 = vunpack.c.l.b16 %v506
    %v547 = vunpack.c.l.b16 %v507
    %v548 = vunpack.c.l.b16 %v508
    %v549 = vunpack.c.l.b16 %v509
    %v550 = vunpack.c.l.b16 %v510
    %v551 = vunpack.c.l.b16 %v511
    %v552 = vunpack.c.l.b16 %v512
    %v553 = vunpack.c.l.b16 %v513
    %v554 = vunpack.c.l.b16 %v514
    %v555 = vunpack.c.l.b16 %v515
    %v556 = vunpack.c.l.b16 %v516
    %v557 = vunpack.c.l.b16 %v517
    %v558 = vunpack.c.l.b16 %v518
    %v559 = vpack.c.b16 %v544, %v543
    %v560 = vpack.c.b16 %v546, %v545
    %v561 = vpack.c.b16 %v548, %v547
    %v562 = vpack.c.b16 %v550, %v549
    %v563 = vpack.c.b16 %v552, %v551
    %v564 = vpack.c.b16 %v554, %v553
    %v565 = vpack.c.b16 %v556, %v555
    %v566 = vpack.c.b16 %v558, %v557
    %575 = vmatprep.subr.bf16.mxu0 0
    %576 = vmatpush1.bf16.msra.mxu0 %v559
    %577 = vmatprep.subr.bf16.mxu0 0
    %578 = vmatpush1.bf16.msra.mxu0 %v560
    %579 = vmatprep.subr.bf16.mxu0 0
    %580 = vmatpush1.bf16.msra.mxu0 %v561
    %581 = vmatprep.subr.bf16.mxu0 0
    %582 = vmatpush1.bf16.msra.mxu0 %v562
    %583 = vmatprep.subr.bf16.mxu0 0
    %584 = vmatpush1.bf16.msra.mxu0 %v563
    %585 = vmatprep.subr.bf16.mxu0 0
    %586 = vmatpush1.bf16.msra.mxu0 %v564
    %587 = vmatprep.subr.bf16.mxu0 0
    %588 = vmatpush1.bf16.msra.mxu0 %v565
    %589 = vmatprep.subr.bf16.mxu0 0
    %590 = vmatpush1.bf16.msra.mxu0 %v566
    %591 = vmatprep.subr.bf16.mxu0 0
    %592 = vmatpush1.bf16.msra.mxu0 0
    %593 = vmatprep.subr.bf16.mxu0 0
    %594 = vmatpush1.bf16.msra.mxu0 0
    %595 = vmatprep.subr.bf16.mxu0 0
    %596 = vmatpush1.bf16.msra.mxu0 0
    %597 = vmatprep.subr.bf16.mxu0 0
    %598 = vmatpush1.bf16.msra.mxu0 0
    %599 = vmatprep.subr.bf16.mxu0 0
    %600 = vmatpush1.bf16.msra.mxu0 0
    %601 = vmatprep.subr.bf16.mxu0 0
    %602 = vmatpush1.bf16.msra.mxu0 0
    %603 = vmatprep.subr.bf16.mxu0 0
    %604 = vmatpush1.bf16.msra.mxu0 0
    %605 = vmatprep.subr.bf16.mxu0 0
    %606 = vmatpush1.bf16.msra.mxu0 0
    %607 = vmatprep.mubr.bf16.mxu0 0
    %608 = vmatmul.mubr.bf16.gmra.mrb[0].mxu0 %v501
    %v609 = vpop.f32.mrb[0].mxu0
    %v610 = vadd.f32 %v525, %v609
    %v611 = vpop.f32.mrb[0].mxu0
    %v612 = vpop.f32.mrb[0].mxu0
    %v613 = vadd.f32 %v525, %v612
    %v614 = vpop.f32.mrb[0].mxu0
    %615 = vdwg.mxu0
    %v616 = vmax.f32 %v610, 0.0
    %v617 = vmax.f32 %v613, 0.0
    %v618 = vpack.c.bf16 %v617, %v616
    %v619 = vld [vmem:[#allocation8] sm:$0xf]
    %v620 = vld [vmem:[#allocation8 + $0x4] sm:$0xf]
    %v621 = vld [vmem:[#allocation8 + $0x8] sm:$0xf]
    %v622 = vld [vmem:[#allocation8 + $0xc] sm:$0xf]
    %v623 = vld [vmem:[#allocation8 + $0x10] sm:$0xf]
    %v624 = vld [vmem:[#allocation8 + $0x14] sm:$0xf]
    %v625 = vld [vmem:[#allocation8 + $0x18] sm:$0xf]
    %v626 = vld [vmem:[#allocation8 + $0x1c] sm:$0xf]
    %v627 = vld [vmem:[#allocation8 + $0x20] sm:$0xf]
    %v628 = vld [vmem:[#allocation8 + $0x24] sm:$0xf]
    %v629 = vld [vmem:[#allocation8 + $0x28] sm:$0xf]
    %v630 = vld [vmem:[#allocation8 + $0x2c] sm:$0xf]
    %v631 = vld [vmem:[#allocation8 + $0x30] sm:$0xf]
    %v632 = vld [vmem:[#allocation8 + $0x34] sm:$0xf]
    %v633 = vld [vmem:[#allocation8 + $0x38] sm:$0xf]
    %v634 = vld [vmem:[#allocation8 + $0x3c] sm:$0xf]
    %v635 = vld [vmem:[%s6] sm:$0x1]
    %v637 = vlaneseq
    %v638 = vshrl.u32 %v637, 7
    %v639 = vsub.s32 0, %v638
    %v640 = vrot.slane %v635, %v639
    %v658 = vunpack.c.l.b16 %v619
    %v659 = vunpack.c.l.b16 %v620
    %v660 = vunpack.c.l.b16 %v621
    %v661 = vunpack.c.l.b16 %v622
    %v662 = vunpack.c.l.b16 %v623
    %v663 = vunpack.c.l.b16 %v624
    %v664 = vunpack.c.l.b16 %v625
    %v665 = vunpack.c.l.b16 %v626
    %v666 = vunpack.c.l.b16 %v627
    %v667 = vunpack.c.l.b16 %v628
    %v668 = vunpack.c.l.b16 %v629
    %v669 = vunpack.c.l.b16 %v630
    %v670 = vunpack.c.l.b16 %v631
    %v671 = vunpack.c.l.b16 %v632
    %v672 = vunpack.c.l.b16 %v633
    %v673 = vunpack.c.l.b16 %v634
    %v674 = vpack.c.b16 %v659, %v658
    %v675 = vpack.c.b16 %v661, %v660
    %v676 = vpack.c.b16 %v663, %v662
    %v677 = vpack.c.b16 %v665, %v664
    %v678 = vpack.c.b16 %v667, %v666
    %v679 = vpack.c.b16 %v669, %v668
    %v680 = vpack.c.b16 %v671, %v670
    %v681 = vpack.c.b16 %v673, %v672
    %690 = vmatprep.subr.bf16.mxu0 0
    %691 = vmatpush1.bf16.msra.mxu0 %v674
    %692 = vmatprep.subr.bf16.mxu0 0
    %693 = vmatpush1.bf16.msra.mxu0 %v675
    %694 = vmatprep.subr.bf16.mxu0 0
    %695 = vmatpush1.bf16.msra.mxu0 %v676
    %696 = vmatprep.subr.bf16.mxu0 0
    %697 = vmatpush1.bf16.msra.mxu0 %v677
    %698 = vmatprep.subr.bf16.mxu0 0
    %699 = vmatpush1.bf16.msra.mxu0 %v678
    %700 = vmatprep.subr.bf16.mxu0 0
    %701 = vmatpush1.bf16.msra.mxu0 %v679
    %702 = vmatprep.subr.bf16.mxu0 0
    %703 = vmatpush1.bf16.msra.mxu0 %v680
    %704 = vmatprep.subr.bf16.mxu0 0
    %705 = vmatpush1.bf16.msra.mxu0 %v681
    %706 = vmatprep.subr.bf16.mxu0 0
    %707 = vmatpush1.bf16.msra.mxu0 0
    %708 = vmatprep.subr.bf16.mxu0 0
    %709 = vmatpush1.bf16.msra.mxu0 0
    %710 = vmatprep.subr.bf16.mxu0 0
    %711 = vmatpush1.bf16.msra.mxu0 0
    %712 = vmatprep.subr.bf16.mxu0 0
    %713 = vmatpush1.bf16.msra.mxu0 0
    %714 = vmatprep.subr.bf16.mxu0 0
    %715 = vmatpush1.bf16.msra.mxu0 0
    %716 = vmatprep.subr.bf16.mxu0 0
    %717 = vmatpush1.bf16.msra.mxu0 0
    %718 = vmatprep.subr.bf16.mxu0 0
    %719 = vmatpush1.bf16.msra.mxu0 0
    %720 = vmatprep.subr.bf16.mxu0 0
    %721 = vmatpush1.bf16.msra.mxu0 0
    %722 = vmatprep.mubr.bf16.mxu0 0
    %723 = vmatmul.mubr.bf16.gmra.mrb[0].mxu0 %v618
    %v724 = vpop.f32.mrb[0].mxu0
    %v725 = vadd.f32 %v640, %v724
    %v726 = vpop.f32.mrb[0].mxu0
    %v727 = vpop.f32.mrb[0].mxu0
    %v728 = vadd.f32 %v640, %v727
    %v729 = vpop.f32.mrb[0].mxu0
    %730 = vdwg.mxu0
    %731 = vst [vmem:[#allocation10] sm:$0xff] %v725
    %732 = vst [vmem:[#allocation10 + $0x8] sm:$0xff] %v728
    // Predicated region
    $region46: #{tpu_custom_call.1} parent=1 // pred_check
      _
    $region47: #{tpu_custom_call.1} parent=1 // pred_check_branch
      %734 = sbr.rel (0) target = $region49
    $region48: #{tpu_custom_call.1} parent=1 // pred_region
      %s736 = ssub.s32 256, 256
      %737 = vsyncadd [#allocation4], %s736
      %s738 = sshll.u32 [#allocation10], 4
      %s739 = int_to_ptr.vmem [resolvable:$true] %s738
      %744 = dma.vmem_to_hbm [thread:$0]  %s739, 256, %s7, [#allocation4], 128, 128, 8
    $region49: #{tpu_custom_call.1} parent=1 // pred_fallthru
      _
    // Predicated region
    $region50: #{tpu_custom_call.1} parent=1 // pred_check
      _
    $region51: #{tpu_custom_call.1} parent=1 // pred_check_branch
      %746 = sbr.rel (0) target = $region53
    $region52: #{tpu_custom_call.1} parent=1 // pred_region
      %747 = dma.done [#allocation4], 256
    $region53: #{tpu_custom_call.1} parent=1 // pred_fallthru
      _
    %748 = vsyncpa [#allocation3], 1
    %749 = vsyncpa [#allocation6], 1
    %750 = vsyncpa [#allocation9], 1
    %751 = vsyncpa [#allocation4], 1

</llo_original>
